<compile_context>
chip_gen: v7x
topology: tpu7x:2x2x1
jax: 0.10.0
libtpu: 0.0.40
codegen_flags: <defaults>
</compile_context>

<pallas_src>
import numpy as np
import jax
import jax.numpy as jnp
from jax.experimental import pallas as pl
from jax.experimental.pallas import tpu as pltpu

INPUT_SHAPE = (2, 4, 16, 16)          # (b, c, h, w)
DIM_REDUCTION_TYPE = "strided_convolution"
NUM_OUTPUT_CLASSES = 10
NUM_FILTERS = 8
NUM_LAYERS = 2
USE_BIAS = False

assert DIM_REDUCTION_TYPE == "strided_convolution" and NUM_LAYERS == 2 and not USE_BIAS

_B, _C, _H, _W = INPUT_SHAPE
_F = NUM_FILTERS
_HP1 = _H + 2                 # padded rows per image at full resolution (18)
_H2 = _H // 2                 # 8
_HP2 = _H2 + 2                # 10
_T1 = _B * _HP1               # 36 rows in the full-res batch-fused slabs
_T2 = _B * _HP2               # 20 rows in the half-res batch-fused slabs


# ------------------------------ fused kernel ---------------------------------
def _fused_forward_kernel(x_ref, w0_ref, w1_ref, w2_ref, w3_ref,
                          sel0_ref, sel1_ref, g0_ref, g1_ref,
                          o_ref, xp0, a1p, a3p):
    f32 = jnp.float32

    # Zero ONLY the halo rows of the stride-1 slabs (interiors are fully
    # overwritten below).  Strided-conv outputs get their halos from the zero
    # rows folded into sel0, so they never touch scratch at all.
    def zero_halos(ref, hp):
        nc = ref.shape[1]
        ref[0:1, :] = jnp.zeros((1, nc), f32)
        for b in range(1, _B):
            ref[b * hp - 1:b * hp + 1, :] = jnp.zeros((2, nc), f32)
        ref[_B * hp - 1:_B * hp, :] = jnp.zeros((1, nc), f32)

    zero_halos(xp0, _HP1)
    zero_halos(a1p, _HP1)
    zero_halos(a3p, _HP2)

    # NCHW -> batch-fused row slab, fused into the kernel: channel c of image b
    # lands at lanes [c*W, (c+1)*W) of that image's interior rows.
    for b in range(_B):
        r0 = b * _HP1 + 1
        for c in range(_C):
            xp0[r0:r0 + _H, c * _W:(c + 1) * _W] = x_ref[b, c, :, :]

    def conv_ky_concat(slab, wcat_ref, n_out, t_rows):
        # ONE MXU dot on the whole batch-fused padded slab; the 3 ky row taps
        # come back as column blocks and are combined with two shifted-slice
        # VPU adds.  Cross-batch straddle rows of z are garbage and are never
        # consumed downstream (interior stores / sel matrices skip them).
        p = jnp.dot(slab, wcat_ref[...], preferred_element_type=f32)
        return (p[0:t_rows - 2, 0:n_out]
                + p[1:t_rows - 1, n_out:2 * n_out]
                + p[2:t_rows, 2 * n_out:3 * n_out])

    # ---- conv_0 (3x3, stride 1) + ReLU ----
    n0 = _W * _F                                        # 128
    z = conv_ky_concat(xp0[...], w0_ref, n0, _T1)       # (34, 128)
    for b in range(_B):
        s = b * _HP1
        a1p[s + 1:s + 1 + _H, :] = jnp.maximum(z[s:s + _H, :], 0.0)

    # ---- dim_reduction_strided_conv_0 (3x3, stride 2) + ReLU ----
    n1 = (_W // 2) * _F                                 # 64
    z = conv_ky_concat(a1p[...], w1_ref, n1, _T1)       # (34, 64)
    # sel0 folds even-row (stride-2) selection AND the zero halo rows of the
    # next padded slab; its rows are one-hot / all-zero so relu(sel0 @ z) is
    # exactly the padded, ReLU'd activation.  Stays in values (no scratch).
    a2p = jnp.maximum(jnp.dot(sel0_ref[...], z, preferred_element_type=f32), 0.0)  # (20, 64)

    # ---- conv_1 (3x3, stride 1) + ReLU ----
    n2 = (_W // 2) * _F                                 # 64
    z = conv_ky_concat(a2p, w2_ref, n2, _T2)            # (18, 64)
    for b in range(_B):
        s = b * _HP2
        a3p[s + 1:s + 1 + _H2, :] = jnp.maximum(z[s:s + _H2, :], 0.0)

    # ---- dim_reduction_strided_conv_1 (stride 2) + ReLU + head ----
    n3 = (_W // 4) * _F                                 # 32
    z = conv_ky_concat(a3p[...], w3_ref, n3, _T2)       # (18, 32)
    # sel1 orders its output rows as (pair_member, pool_row, batch) so the 2x2
    # avg-pool's vertical pair sum is a single contiguous slice add.
    act = jnp.maximum(jnp.dot(sel1_ref[...], z, preferred_element_type=f32), 0.0)  # (4B, 32)
    ssum = act[0:2 * _B, :] + act[2 * _B:4 * _B, :]     # (2B, 32): rows (pool_row, batch)
    logits = (jnp.dot(ssum[0:_B, :], g0_ref[...], preferred_element_type=f32)
              + jnp.dot(ssum[_B:2 * _B, :], g1_ref[...], preferred_element_type=f32))
    o_ref[...] = logits


# ------------------------------ wrapper (glue) --------------------------------
def pallas_forward(x_nchw, prepped):
    x = x_nchw.astype(jnp.float32)
    return pl.pallas_call(
        _fused_forward_kernel,
        out_shape=jax.ShapeDtypeStruct((_B, NUM_OUTPUT_CLASSES), jnp.float32),
        scratch_shapes=[
            pltpu.VMEM((_T1, _C * _W), jnp.float32),          # padded input slab
            pltpu.VMEM((_T1, _W * _F), jnp.float32),          # conv_0 output (padded)
            pltpu.VMEM((_T2, (_W // 2) * _F), jnp.float32),   # conv_1 output (padded)
        ],
    )(x, prepped["w0"], prepped["w1"], prepped["w2"], prepped["w3"],
      prepped["sel0"], prepped["sel1"], prepped["g0"], prepped["g1"])


# ------------------------ one-time weight preprocessing -----------------------
def prepare_params(params):
    """Re-layout PyTorch-convention weights into the fused kernel's
    one-dot-per-conv form.  Called once at init time, never on the forward
    path.  Lane convention everywhere: lane = channel * width + column."""

    def tap_weights_cat(w_oihw, w_in, stride):
        w = np.asarray(w_oihw, np.float32)               # (Cout, Cin, 3, 3)
        c_out, c_in = w.shape[0], w.shape[1]
        w_out = w_in // stride
        t = np.zeros((3, c_in, w_in, c_out, w_out), np.float32)
        for ky in range(3):
            for kx in range(3):
                for wo in range(w_out):
                    wi = stride * wo + kx - 1
                    if 0 <= wi < w_in:                    # out-of-range == zero pad
                        t[ky, :, wi, :, wo] += w[:, :, ky, kx].T
        t = t.reshape(3, c_in * w_in, c_out * w_out)
        # ky-concat along N: kernel does one dot then two shifted-slice adds.
        return jnp.asarray(np.concatenate([t[0], t[1], t[2]], axis=1))

    def sel_strided_padded(h_in):
        # Even-row (stride-2) selection + zero halo rows of the next padded slab.
        h_out, hp_in, hp_out = h_in // 2, h_in + 2, h_in // 2 + 2
        s = np.zeros((_B * hp_out, _B * hp_in - 2), np.float32)
        for b in range(_B):
            for o in range(h_out):
                s[b * hp_out + 1 + o, b * hp_in + 2 * o] = 1.0
        return jnp.asarray(s)

    def sel_strided_head(h_in):
        # Even-row selection with rows ordered (pair_member, pool_row, batch)
        # so the head's vertical pool-pair sum is one contiguous slice add.
        hp_in = h_in + 2
        s = np.zeros((4 * _B, _B * hp_in - 2), np.float32)
        for jp in range(2):
            for ip in range(2):
                for b in range(_B):
                    o = 2 * ip + jp
                    s[jp * 2 * _B + ip * _B + b, b * hp_in + 2 * o] = 1.0
        return jnp.asarray(s)

    def head_weights(w_lin):
        # 0.25*(2x2 avg pool) + NCHW flatten + linear folded into two (4*F, K)
        # matrices applied to the vertical pool-pair sums.
        wl = np.asarray(w_lin, np.float32)                # (K, F*2*2), NCHW flatten
        k = wl.shape[0]
        g = np.zeros((2, 4 * _F, k), np.float32)
        for ip in range(2):
            for ch in range(_F):
                for j in range(4):
                    g[ip, ch * 4 + j, :] = 0.25 * wl[:, ch * 4 + ip * 2 + (j // 2)]
        return jnp.asarray(g[0]), jnp.asarray(g[1])

    g0, g1 = head_weights(params["logit_linear_layer"])
    return {
        "w0": tap_weights_cat(params["conv_0"], _W, 1),
        "w1": tap_weights_cat(params["dim_reduction_strided_conv_0"], _W, 2),
        "w2": tap_weights_cat(params["conv_1"], _W // 2, 1),
        "w3": tap_weights_cat(params["dim_reduction_strided_conv_1"], _W // 2, 2),
        "sel0": sel_strided_padded(_H),
        "sel1": sel_strided_head(_H2),
        "g0": g0,
        "g1": g1,
    }


# ----------------------------- pure-JAX reference -----------------------------
def _conv_ref(x, w, stride, padding):
    return jax.lax.conv_general_dilated(
        x, w, window_strides=(stride, stride),
        padding=[(padding, padding), (padding, padding)],
        dimension_numbers=("NCHW", "OIHW", "NCHW"))


def reference_forward(x_nchw, params):
    out = x_nchw
    for i in range(NUM_LAYERS):
        out = jax.nn.relu(_conv_ref(out, params[f"conv_{i}"], 1, 1))
        out = jax.nn.relu(_conv_ref(out, params[f"dim_reduction_strided_conv_{i}"], 2, 1))
    B, C, H, W = out.shape
    if W != 2:  # adaptive_avg_pool2d(out, 2); here H == W == 4 -> exact 2x2 bins
        out = out.reshape(B, C, 2, H // 2, 2, W // 2).mean(axis=(3, 5))
    out = out.reshape(B, -1)
    return out @ params["logit_linear_layer"].T


# ----------------------------- parameter init ---------------------------------
def init_params(key):
    params = {}
    c_in = INPUT_SHAPE[1]
    for i in range(NUM_LAYERS):
        key, k1, k2 = jax.random.split(key, 3)
        b1 = 1.0 / np.sqrt(c_in * 9)
        params[f"conv_{i}"] = jax.random.uniform(
            k1, (NUM_FILTERS, c_in, 3, 3), jnp.float32, -b1, b1)
        b2 = 1.0 / np.sqrt(NUM_FILTERS * 9)
        params[f"dim_reduction_strided_conv_{i}"] = jax.random.uniform(
            k2, (NUM_FILTERS, NUM_FILTERS, 3, 3), jnp.float32, -b2, b2)
        c_in = NUM_FILTERS
    key, kl = jax.random.split(key)
    in_features = NUM_FILTERS * 2 * 2
    bl = 1.0 / np.sqrt(in_features)
    params["logit_linear_layer"] = jax.random.uniform(
        kl, (NUM_OUTPUT_CLASSES, in_features), jnp.float32, -bl, bl)
    # use_bias=False -> no bias parameters anywhere.
    return params


if __name__ == "__main__":
    root = jax.random.PRNGKey(0)
    kx_, kp_ = jax.random.split(root)
    x = jax.random.normal(kx_, INPUT_SHAPE, jnp.float32)
    params = init_params(kp_)
    prepped = prepare_params(params)          # hoisted, one-time weight re-layout

    fwd = jax.jit(pallas_forward)
    out = jax.block_until_ready(fwd(x, prepped))
    assert out.shape == (INPUT_SHAPE[0], NUM_OUTPUT_CLASSES)

    ref = reference_forward(x, params)
    if not np.allclose(np.asarray(out), np.asarray(ref), rtol=1e-4, atol=1e-4):
        raise AssertionError("Pallas output does not match JAX reference")
    print("KERNEL_OK")
</pallas_src>

<mosaic_0001>
module attributes {stable_mosaic.version = 11 : i64} {
  func.func @_fused_forward_kernel(%arg0: memref<2x4x16x16xf32, #tpu.memory_space<vmem>>, %arg1: memref<64x384xf32, #tpu.memory_space<vmem>>, %arg2: memref<128x192xf32, #tpu.memory_space<vmem>>, %arg3: memref<64x192xf32, #tpu.memory_space<vmem>>, %arg4: memref<64x96xf32, #tpu.memory_space<vmem>>, %arg5: memref<20x34xf32, #tpu.memory_space<vmem>>, %arg6: memref<8x18xf32, #tpu.memory_space<vmem>>, %arg7: memref<32x10xf32, #tpu.memory_space<vmem>>, %arg8: memref<32x10xf32, #tpu.memory_space<vmem>>, %arg9: memref<2x10xf32, #tpu.memory_space<vmem>>, %arg10: memref<36x64xf32, #tpu.memory_space<vmem>>, %arg11: memref<36x128xf32, #tpu.memory_space<vmem>>, %arg12: memref<20x64xf32, #tpu.memory_space<vmem>>) attributes {dimension_semantics = [], scalar_prefetch = 0 : i64, scratch_operands = 3 : i64, tpu.core_type = #tpu.core_type<tc>} {
    %cst = arith.constant 0.000000e+00 : f32
    %0 = vector.broadcast %cst : f32 to vector<1x64xf32>
    %c0 = arith.constant 0 : index
    %c0_0 = arith.constant 0 : index
    %1 = vector.load %arg10[%c0, %c0_0] : memref<36x64xf32, #tpu.memory_space<vmem>>, vector<1x64xf32>
    tpu.vector_store %arg10[%c0, %c0_0], %0 {strides = array<i32>} : memref<36x64xf32, #tpu.memory_space<vmem>>, vector<1x64xf32>,
    %cst_1 = arith.constant 0.000000e+00 : f32
    %2 = vector.broadcast %cst_1 : f32 to vector<2x64xf32>
    %c17 = arith.constant 17 : index
    %c0_2 = arith.constant 0 : index
    %3 = vector.load %arg10[%c17, %c0_2] : memref<36x64xf32, #tpu.memory_space<vmem>>, vector<2x64xf32>
    tpu.vector_store %arg10[%c17, %c0_2], %2 {strides = array<i32>} : memref<36x64xf32, #tpu.memory_space<vmem>>, vector<2x64xf32>,
    %cst_3 = arith.constant 0.000000e+00 : f32
    %4 = vector.broadcast %cst_3 : f32 to vector<1x64xf32>
    %c35 = arith.constant 35 : index
    %c0_4 = arith.constant 0 : index
    %5 = vector.load %arg10[%c35, %c0_4] : memref<36x64xf32, #tpu.memory_space<vmem>>, vector<1x64xf32>
    tpu.vector_store %arg10[%c35, %c0_4], %4 {strides = array<i32>} : memref<36x64xf32, #tpu.memory_space<vmem>>, vector<1x64xf32>,
    %cst_5 = arith.constant 0.000000e+00 : f32
    %6 = vector.broadcast %cst_5 : f32 to vector<1x128xf32>
    %c0_6 = arith.constant 0 : index
    %c0_7 = arith.constant 0 : index
    %7 = vector.load %arg11[%c0_6, %c0_7] : memref<36x128xf32, #tpu.memory_space<vmem>>, vector<1x128xf32>
    tpu.vector_store %arg11[%c0_6, %c0_7], %6 {strides = array<i32>} : memref<36x128xf32, #tpu.memory_space<vmem>>, vector<1x128xf32>,
    %cst_8 = arith.constant 0.000000e+00 : f32
    %8 = vector.broadcast %cst_8 : f32 to vector<2x128xf32>
    %c17_9 = arith.constant 17 : index
    %c0_10 = arith.constant 0 : index
    %9 = vector.load %arg11[%c17_9, %c0_10] : memref<36x128xf32, #tpu.memory_space<vmem>>, vector<2x128xf32>
    tpu.vector_store %arg11[%c17_9, %c0_10], %8 {strides = array<i32>} : memref<36x128xf32, #tpu.memory_space<vmem>>, vector<2x128xf32>,
    %cst_11 = arith.constant 0.000000e+00 : f32
    %10 = vector.broadcast %cst_11 : f32 to vector<1x128xf32>
    %c35_12 = arith.constant 35 : index
    %c0_13 = arith.constant 0 : index
    %11 = vector.load %arg11[%c35_12, %c0_13] : memref<36x128xf32, #tpu.memory_space<vmem>>, vector<1x128xf32>
    tpu.vector_store %arg11[%c35_12, %c0_13], %10 {strides = array<i32>} : memref<36x128xf32, #tpu.memory_space<vmem>>, vector<1x128xf32>,
    %cst_14 = arith.constant 0.000000e+00 : f32
    %12 = vector.broadcast %cst_14 : f32 to vector<1x64xf32>
    %c0_15 = arith.constant 0 : index
    %c0_16 = arith.constant 0 : index
    %13 = vector.load %arg12[%c0_15, %c0_16] : memref<20x64xf32, #tpu.memory_space<vmem>>, vector<1x64xf32>
    tpu.vector_store %arg12[%c0_15, %c0_16], %12 {strides = array<i32>} : memref<20x64xf32, #tpu.memory_space<vmem>>, vector<1x64xf32>,
    %cst_17 = arith.constant 0.000000e+00 : f32
    %14 = vector.broadcast %cst_17 : f32 to vector<2x64xf32>
    %c9 = arith.constant 9 : index
    %c0_18 = arith.constant 0 : index
    %15 = vector.load %arg12[%c9, %c0_18] : memref<20x64xf32, #tpu.memory_space<vmem>>, vector<2x64xf32>
    tpu.vector_store %arg12[%c9, %c0_18], %14 {strides = array<i32>} : memref<20x64xf32, #tpu.memory_space<vmem>>, vector<2x64xf32>,
    %cst_19 = arith.constant 0.000000e+00 : f32
    %16 = vector.broadcast %cst_19 : f32 to vector<1x64xf32>
    %c19 = arith.constant 19 : index
    %c0_20 = arith.constant 0 : index
    %17 = vector.load %arg12[%c19, %c0_20] : memref<20x64xf32, #tpu.memory_space<vmem>>, vector<1x64xf32>
    tpu.vector_store %arg12[%c19, %c0_20], %16 {strides = array<i32>} : memref<20x64xf32, #tpu.memory_space<vmem>>, vector<1x64xf32>,
    %c0_21 = arith.constant 0 : index
    %c0_22 = arith.constant 0 : index
    %c0_23 = arith.constant 0 : index
    %c0_24 = arith.constant 0 : index
    %18 = vector.load %arg0[%c0_21, %c0_22, %c0_23, %c0_24] : memref<2x4x16x16xf32, #tpu.memory_space<vmem>>, vector<1x1x16x16xf32>
    %19 = vector.shape_cast %18 : vector<1x1x16x16xf32> to vector<16x16xf32>
    %c1 = arith.constant 1 : index
    %c0_25 = arith.constant 0 : index
    %20 = vector.load %arg10[%c1, %c0_25] : memref<36x64xf32, #tpu.memory_space<vmem>>, vector<16x16xf32>
    tpu.vector_store %arg10[%c1, %c0_25], %19 {strides = array<i32>} : memref<36x64xf32, #tpu.memory_space<vmem>>, vector<16x16xf32>,
    %c0_26 = arith.constant 0 : index
    %c1_27 = arith.constant 1 : index
    %c0_28 = arith.constant 0 : index
    %c0_29 = arith.constant 0 : index
    %21 = vector.load %arg0[%c0_26, %c1_27, %c0_28, %c0_29] : memref<2x4x16x16xf32, #tpu.memory_space<vmem>>, vector<1x1x16x16xf32>
    %22 = vector.shape_cast %21 : vector<1x1x16x16xf32> to vector<16x16xf32>
    %c1_30 = arith.constant 1 : index
    %c16 = arith.constant 16 : index
    %23 = vector.load %arg10[%c1_30, %c16] : memref<36x64xf32, #tpu.memory_space<vmem>>, vector<16x16xf32>
    tpu.vector_store %arg10[%c1_30, %c16], %22 {strides = array<i32>} : memref<36x64xf32, #tpu.memory_space<vmem>>, vector<16x16xf32>,
    %c0_31 = arith.constant 0 : index
    %c2 = arith.constant 2 : index
    %c0_32 = arith.constant 0 : index
    %c0_33 = arith.constant 0 : index
    %24 = vector.load %arg0[%c0_31, %c2, %c0_32, %c0_33] : memref<2x4x16x16xf32, #tpu.memory_space<vmem>>, vector<1x1x16x16xf32>
    %25 = vector.shape_cast %24 : vector<1x1x16x16xf32> to vector<16x16xf32>
    %c1_34 = arith.constant 1 : index
    %c32 = arith.constant 32 : index
    %26 = vector.load %arg10[%c1_34, %c32] : memref<36x64xf32, #tpu.memory_space<vmem>>, vector<16x16xf32>
    tpu.vector_store %arg10[%c1_34, %c32], %25 {strides = array<i32>} : memref<36x64xf32, #tpu.memory_space<vmem>>, vector<16x16xf32>,
    %c0_35 = arith.constant 0 : index
    %c3 = arith.constant 3 : index
    %c0_36 = arith.constant 0 : index
    %c0_37 = arith.constant 0 : index
    %27 = vector.load %arg0[%c0_35, %c3, %c0_36, %c0_37] : memref<2x4x16x16xf32, #tpu.memory_space<vmem>>, vector<1x1x16x16xf32>
    %28 = vector.shape_cast %27 : vector<1x1x16x16xf32> to vector<16x16xf32>
    %c1_38 = arith.constant 1 : index
    %c48 = arith.constant 48 : index
    %29 = vector.load %arg10[%c1_38, %c48] : memref<36x64xf32, #tpu.memory_space<vmem>>, vector<16x16xf32>
    tpu.vector_store %arg10[%c1_38, %c48], %28 {strides = array<i32>} : memref<36x64xf32, #tpu.memory_space<vmem>>, vector<16x16xf32>,
    %c1_39 = arith.constant 1 : index
    %c0_40 = arith.constant 0 : index
    %c0_41 = arith.constant 0 : index
    %c0_42 = arith.constant 0 : index
    %30 = vector.load %arg0[%c1_39, %c0_40, %c0_41, %c0_42] : memref<2x4x16x16xf32, #tpu.memory_space<vmem>>, vector<1x1x16x16xf32>
    %31 = vector.shape_cast %30 : vector<1x1x16x16xf32> to vector<16x16xf32>
    %c19_43 = arith.constant 19 : index
    %c0_44 = arith.constant 0 : index
    %32 = vector.load %arg10[%c19_43, %c0_44] : memref<36x64xf32, #tpu.memory_space<vmem>>, vector<16x16xf32>
    tpu.vector_store %arg10[%c19_43, %c0_44], %31 {strides = array<i32>} : memref<36x64xf32, #tpu.memory_space<vmem>>, vector<16x16xf32>,
    %c1_45 = arith.constant 1 : index
    %c1_46 = arith.constant 1 : index
    %c0_47 = arith.constant 0 : index
    %c0_48 = arith.constant 0 : index
    %33 = vector.load %arg0[%c1_45, %c1_46, %c0_47, %c0_48] : memref<2x4x16x16xf32, #tpu.memory_space<vmem>>, vector<1x1x16x16xf32>
    %34 = vector.shape_cast %33 : vector<1x1x16x16xf32> to vector<16x16xf32>
    %c19_49 = arith.constant 19 : index
    %c16_50 = arith.constant 16 : index
    %35 = vector.load %arg10[%c19_49, %c16_50] : memref<36x64xf32, #tpu.memory_space<vmem>>, vector<16x16xf32>
    tpu.vector_store %arg10[%c19_49, %c16_50], %34 {strides = array<i32>} : memref<36x64xf32, #tpu.memory_space<vmem>>, vector<16x16xf32>,
    %c1_51 = arith.constant 1 : index
    %c2_52 = arith.constant 2 : index
    %c0_53 = arith.constant 0 : index
    %c0_54 = arith.constant 0 : index
    %36 = vector.load %arg0[%c1_51, %c2_52, %c0_53, %c0_54] : memref<2x4x16x16xf32, #tpu.memory_space<vmem>>, vector<1x1x16x16xf32>
    %37 = vector.shape_cast %36 : vector<1x1x16x16xf32> to vector<16x16xf32>
    %c19_55 = arith.constant 19 : index
    %c32_56 = arith.constant 32 : index
    %38 = vector.load %arg10[%c19_55, %c32_56] : memref<36x64xf32, #tpu.memory_space<vmem>>, vector<16x16xf32>
    tpu.vector_store %arg10[%c19_55, %c32_56], %37 {strides = array<i32>} : memref<36x64xf32, #tpu.memory_space<vmem>>, vector<16x16xf32>,
    %c1_57 = arith.constant 1 : index
    %c3_58 = arith.constant 3 : index
    %c0_59 = arith.constant 0 : index
    %c0_60 = arith.constant 0 : index
    %39 = vector.load %arg0[%c1_57, %c3_58, %c0_59, %c0_60] : memref<2x4x16x16xf32, #tpu.memory_space<vmem>>, vector<1x1x16x16xf32>
    %40 = vector.shape_cast %39 : vector<1x1x16x16xf32> to vector<16x16xf32>
    %c19_61 = arith.constant 19 : index
    %c48_62 = arith.constant 48 : index
    %41 = vector.load %arg10[%c19_61, %c48_62] : memref<36x64xf32, #tpu.memory_space<vmem>>, vector<16x16xf32>
    tpu.vector_store %arg10[%c19_61, %c48_62], %40 {strides = array<i32>} : memref<36x64xf32, #tpu.memory_space<vmem>>, vector<16x16xf32>,
    %c0_63 = arith.constant 0 : index
    %c0_64 = arith.constant 0 : index
    %42 = vector.load %arg10[%c0_63, %c0_64] : memref<36x64xf32, #tpu.memory_space<vmem>>, vector<36x64xf32>
    %c0_65 = arith.constant 0 : index
    %c0_66 = arith.constant 0 : index
    %43 = vector.load %arg1[%c0_65, %c0_66] : memref<64x384xf32, #tpu.memory_space<vmem>>, vector<64x384xf32>
    %cst_67 = arith.constant dense<0.000000e+00> : vector<36x384xf32>
    %44 = tpu.matmul %42, %43, %cst_67 {dimension_numbers = #tpu.dot_dimension_numbers<[1], [0], [0], [1], [0, 0, 1, 1], [], []>} : vector<36x64xf32>, vector<64x384xf32>, vector<36x384xf32> -> vector<36x384xf32>
    %45 = vector.extract_strided_slice %44 {offsets = [0, 0], sizes = [34, 128], strides = [1, 1]} : vector<36x384xf32> to vector<34x128xf32>
    %46 = vector.extract_strided_slice %44 {offsets = [1, 128], sizes = [34, 128], strides = [1, 1]} : vector<36x384xf32> to vector<34x128xf32>
    %47 = arith.addf %45, %46 : vector<34x128xf32>
    %48 = vector.extract_strided_slice %44 {offsets = [2, 256], sizes = [34, 128], strides = [1, 1]} : vector<36x384xf32> to vector<34x128xf32>
    %49 = arith.addf %47, %48 : vector<34x128xf32>
    %50 = vector.extract_strided_slice %49 {offsets = [0, 0], sizes = [16, 128], strides = [1, 1]} : vector<34x128xf32> to vector<16x128xf32>
    %cst_68 = arith.constant 0.000000e+00 : f32
    %51 = vector.broadcast %cst_68 : f32 to vector<16x128xf32>
    %52 = arith.maximumf %50, %51 : vector<16x128xf32>
    %c1_69 = arith.constant 1 : index
    %c0_70 = arith.constant 0 : index
    %53 = vector.load %arg11[%c1_69, %c0_70] : memref<36x128xf32, #tpu.memory_space<vmem>>, vector<16x128xf32>
    tpu.vector_store %arg11[%c1_69, %c0_70], %52 {strides = array<i32>} : memref<36x128xf32, #tpu.memory_space<vmem>>, vector<16x128xf32>,
    %54 = vector.extract_strided_slice %49 {offsets = [18, 0], sizes = [16, 128], strides = [1, 1]} : vector<34x128xf32> to vector<16x128xf32>
    %cst_71 = arith.constant 0.000000e+00 : f32
    %55 = vector.broadcast %cst_71 : f32 to vector<16x128xf32>
    %56 = arith.maximumf %54, %55 : vector<16x128xf32>
    %c19_72 = arith.constant 19 : index
    %c0_73 = arith.constant 0 : index
    %57 = vector.load %arg11[%c19_72, %c0_73] : memref<36x128xf32, #tpu.memory_space<vmem>>, vector<16x128xf32>
    tpu.vector_store %arg11[%c19_72, %c0_73], %56 {strides = array<i32>} : memref<36x128xf32, #tpu.memory_space<vmem>>, vector<16x128xf32>,
    %c0_74 = arith.constant 0 : index
    %c0_75 = arith.constant 0 : index
    %58 = vector.load %arg11[%c0_74, %c0_75] : memref<36x128xf32, #tpu.memory_space<vmem>>, vector<36x128xf32>
    %c0_76 = arith.constant 0 : index
    %c0_77 = arith.constant 0 : index
    %59 = vector.load %arg2[%c0_76, %c0_77] : memref<128x192xf32, #tpu.memory_space<vmem>>, vector<128x192xf32>
    %cst_78 = arith.constant dense<0.000000e+00> : vector<36x192xf32>
    %60 = tpu.matmul %58, %59, %cst_78 {dimension_numbers = #tpu.dot_dimension_numbers<[1], [0], [0], [1], [0, 0, 1, 1], [], []>} : vector<36x128xf32>, vector<128x192xf32>, vector<36x192xf32> -> vector<36x192xf32>
    %61 = vector.extract_strided_slice %60 {offsets = [0, 0], sizes = [34, 64], strides = [1, 1]} : vector<36x192xf32> to vector<34x64xf32>
    %62 = vector.extract_strided_slice %60 {offsets = [1, 64], sizes = [34, 64], strides = [1, 1]} : vector<36x192xf32> to vector<34x64xf32>
    %63 = arith.addf %61, %62 : vector<34x64xf32>
    %64 = vector.extract_strided_slice %60 {offsets = [2, 128], sizes = [34, 64], strides = [1, 1]} : vector<36x192xf32> to vector<34x64xf32>
    %65 = arith.addf %63, %64 : vector<34x64xf32>
    %c0_79 = arith.constant 0 : index
    %c0_80 = arith.constant 0 : index
    %66 = vector.load %arg5[%c0_79, %c0_80] : memref<20x34xf32, #tpu.memory_space<vmem>>, vector<20x34xf32>
    %cst_81 = arith.constant dense<0.000000e+00> : vector<20x64xf32>
    %67 = tpu.matmul %66, %65, %cst_81 {dimension_numbers = #tpu.dot_dimension_numbers<[1], [0], [0], [1], [0, 0, 1, 1], [], []>} : vector<20x34xf32>, vector<34x64xf32>, vector<20x64xf32> -> vector<20x64xf32>
    %cst_82 = arith.constant 0.000000e+00 : f32
    %68 = vector.broadcast %cst_82 : f32 to vector<20x64xf32>
    %69 = arith.maximumf %67, %68 : vector<20x64xf32>
    %c0_83 = arith.constant 0 : index
    %c0_84 = arith.constant 0 : index
    %70 = vector.load %arg3[%c0_83, %c0_84] : memref<64x192xf32, #tpu.memory_space<vmem>>, vector<64x192xf32>
    %cst_85 = arith.constant dense<0.000000e+00> : vector<20x192xf32>
    %71 = tpu.matmul %69, %70, %cst_85 {dimension_numbers = #tpu.dot_dimension_numbers<[1], [0], [0], [1], [0, 0, 1, 1], [], []>} : vector<20x64xf32>, vector<64x192xf32>, vector<20x192xf32> -> vector<20x192xf32>
    %72 = vector.extract_strided_slice %71 {offsets = [0, 0], sizes = [18, 64], strides = [1, 1]} : vector<20x192xf32> to vector<18x64xf32>
    %73 = vector.extract_strided_slice %71 {offsets = [1, 64], sizes = [18, 64], strides = [1, 1]} : vector<20x192xf32> to vector<18x64xf32>
    %74 = arith.addf %72, %73 : vector<18x64xf32>
    %75 = vector.extract_strided_slice %71 {offsets = [2, 128], sizes = [18, 64], strides = [1, 1]} : vector<20x192xf32> to vector<18x64xf32>
    %76 = arith.addf %74, %75 : vector<18x64xf32>
    %77 = vector.extract_strided_slice %76 {offsets = [0, 0], sizes = [8, 64], strides = [1, 1]} : vector<18x64xf32> to vector<8x64xf32>
    %cst_86 = arith.constant 0.000000e+00 : f32
    %78 = vector.broadcast %cst_86 : f32 to vector<8x64xf32>
    %79 = arith.maximumf %77, %78 : vector<8x64xf32>
    %c1_87 = arith.constant 1 : index
    %c0_88 = arith.constant 0 : index
    %80 = vector.load %arg12[%c1_87, %c0_88] : memref<20x64xf32, #tpu.memory_space<vmem>>, vector<8x64xf32>
    tpu.vector_store %arg12[%c1_87, %c0_88], %79 {strides = array<i32>} : memref<20x64xf32, #tpu.memory_space<vmem>>, vector<8x64xf32>,
    %81 = vector.extract_strided_slice %76 {offsets = [10, 0], sizes = [8, 64], strides = [1, 1]} : vector<18x64xf32> to vector<8x64xf32>
    %cst_89 = arith.constant 0.000000e+00 : f32
    %82 = vector.broadcast %cst_89 : f32 to vector<8x64xf32>
    %83 = arith.maximumf %81, %82 : vector<8x64xf32>
    %c11 = arith.constant 11 : index
    %c0_90 = arith.constant 0 : index
    %84 = vector.load %arg12[%c11, %c0_90] : memref<20x64xf32, #tpu.memory_space<vmem>>, vector<8x64xf32>
    tpu.vector_store %arg12[%c11, %c0_90], %83 {strides = array<i32>} : memref<20x64xf32, #tpu.memory_space<vmem>>, vector<8x64xf32>,
    %c0_91 = arith.constant 0 : index
    %c0_92 = arith.constant 0 : index
    %85 = vector.load %arg12[%c0_91, %c0_92] : memref<20x64xf32, #tpu.memory_space<vmem>>, vector<20x64xf32>
    %c0_93 = arith.constant 0 : index
    %c0_94 = arith.constant 0 : index
    %86 = vector.load %arg4[%c0_93, %c0_94] : memref<64x96xf32, #tpu.memory_space<vmem>>, vector<64x96xf32>
    %cst_95 = arith.constant dense<0.000000e+00> : vector<20x96xf32>
    %87 = tpu.matmul %85, %86, %cst_95 {dimension_numbers = #tpu.dot_dimension_numbers<[1], [0], [0], [1], [0, 0, 1, 1], [], []>} : vector<20x64xf32>, vector<64x96xf32>, vector<20x96xf32> -> vector<20x96xf32>
    %88 = vector.extract_strided_slice %87 {offsets = [0, 0], sizes = [18, 32], strides = [1, 1]} : vector<20x96xf32> to vector<18x32xf32>
    %89 = vector.extract_strided_slice %87 {offsets = [1, 32], sizes = [18, 32], strides = [1, 1]} : vector<20x96xf32> to vector<18x32xf32>
    %90 = arith.addf %88, %89 : vector<18x32xf32>
    %91 = vector.extract_strided_slice %87 {offsets = [2, 64], sizes = [18, 32], strides = [1, 1]} : vector<20x96xf32> to vector<18x32xf32>
    %92 = arith.addf %90, %91 : vector<18x32xf32>
    %c0_96 = arith.constant 0 : index
    %c0_97 = arith.constant 0 : index
    %93 = vector.load %arg6[%c0_96, %c0_97] : memref<8x18xf32, #tpu.memory_space<vmem>>, vector<8x18xf32>
    %cst_98 = arith.constant dense<0.000000e+00> : vector<8x32xf32>
    %94 = tpu.matmul %93, %92, %cst_98 {dimension_numbers = #tpu.dot_dimension_numbers<[1], [0], [0], [1], [0, 0, 1, 1], [], []>} : vector<8x18xf32>, vector<18x32xf32>, vector<8x32xf32> -> vector<8x32xf32>
    %cst_99 = arith.constant 0.000000e+00 : f32
    %95 = vector.broadcast %cst_99 : f32 to vector<8x32xf32>
    %96 = arith.maximumf %94, %95 : vector<8x32xf32>
    %97 = vector.extract_strided_slice %96 {offsets = [0, 0], sizes = [4, 32], strides = [1, 1]} : vector<8x32xf32> to vector<4x32xf32>
    %98 = vector.extract_strided_slice %96 {offsets = [4, 0], sizes = [4, 32], strides = [1, 1]} : vector<8x32xf32> to vector<4x32xf32>
    %99 = arith.addf %97, %98 : vector<4x32xf32>
    %100 = vector.extract_strided_slice %99 {offsets = [0, 0], sizes = [2, 32], strides = [1, 1]} : vector<4x32xf32> to vector<2x32xf32>
    %c0_100 = arith.constant 0 : index
    %c0_101 = arith.constant 0 : index
    %101 = vector.load %arg7[%c0_100, %c0_101] : memref<32x10xf32, #tpu.memory_space<vmem>>, vector<32x10xf32>
    %cst_102 = arith.constant dense<0.000000e+00> : vector<2x10xf32>
    %102 = tpu.matmul %100, %101, %cst_102 {dimension_numbers = #tpu.dot_dimension_numbers<[1], [0], [0], [1], [0, 0, 1, 1], [], []>} : vector<2x32xf32>, vector<32x10xf32>, vector<2x10xf32> -> vector<2x10xf32>
    %103 = vector.extract_strided_slice %99 {offsets = [2, 0], sizes = [2, 32], strides = [1, 1]} : vector<4x32xf32> to vector<2x32xf32>
    %c0_103 = arith.constant 0 : index
    %c0_104 = arith.constant 0 : index
    %104 = vector.load %arg8[%c0_103, %c0_104] : memref<32x10xf32, #tpu.memory_space<vmem>>, vector<32x10xf32>
    %cst_105 = arith.constant dense<0.000000e+00> : vector<2x10xf32>
    %105 = tpu.matmul %103, %104, %cst_105 {dimension_numbers = #tpu.dot_dimension_numbers<[1], [0], [0], [1], [0, 0, 1, 1], [], []>} : vector<2x32xf32>, vector<32x10xf32>, vector<2x10xf32> -> vector<2x10xf32>
    %106 = arith.addf %102, %105 : vector<2x10xf32>
    %c0_106 = arith.constant 0 : index
    %c0_107 = arith.constant 0 : index
    %107 = vector.load %arg9[%c0_106, %c0_107] : memref<2x10xf32, #tpu.memory_space<vmem>>, vector<2x10xf32>
    tpu.vector_store %arg9[%c0_106, %c0_107], %106 {strides = array<i32>} : memref<2x10xf32, #tpu.memory_space<vmem>>, vector<2x10xf32>,
    return
  }
}

</mosaic_0001>

<llo_original>
// kernel: pallas_forward.1
$region0: #{pallas_forward.1}
  #allocation0 [shape = 'u32[]', space=smem, size = 0x4, offset = 0x4, fixed_abs, tag = 'smem constant byte address 0x4 - core index']
  #allocation1 [shape = 'u32[144,128]{1,0:T(1,128)}', space=vmem, size = 0x12000, scoped, tag = 'internal scratch']
  #allocation2 [shape = 'f32[36,64]{1,0:T(8,128)}', space=vmem, size = 0x5000, scoped, tag = 'scratch operand']
  #allocation3 [shape = 'f32[36,128]{1,0:T(8,128)}', space=vmem, size = 0x5000, scoped, tag = 'scratch operand']
  #allocation4 [shape = 'f32[20,64]{1,0:T(8,128)}', space=vmem, size = 0x3000, scoped, tag = 'scratch operand']
  %s0 = inlined_call_operand.vmem [shape: f32[2,4,16,16], index: 0, kind: input, shape index: {}]
  %s1 = inlined_call_operand.vmem [shape: f32[64,384], index: 1, kind: input, shape index: {}]
  %s2 = inlined_call_operand.vmem [shape: f32[128,192], index: 2, kind: input, shape index: {}]
  %s3 = inlined_call_operand.vmem [shape: f32[64,192], index: 3, kind: input, shape index: {}]
  %s4 = inlined_call_operand.vmem [shape: f32[64,96], index: 4, kind: input, shape index: {}]
  %s5 = inlined_call_operand.vmem [shape: f32[20,34], index: 5, kind: input, shape index: {}]
  %s6 = inlined_call_operand.vmem [shape: f32[8,18], index: 6, kind: input, shape index: {}]
  %s7 = inlined_call_operand.vmem [shape: f32[32,10], index: 7, kind: input, shape index: {}]
  %s8 = inlined_call_operand.vmem [shape: f32[32,10], index: 8, kind: input, shape index: {}]
  %s9 = inlined_call_operand.hbm [shape: f32[2,10], index: 9, kind: output, shape index: {}]
  %s10 = sld [smem:[#allocation0]]
  $region46: #{pallas_forward.1} parent=0
    _
  %s12 = ssub.s32 1, %s10
  %s13 = scalar_select 0, %s12, %s10
  $region1: #{pallas_forward.1} parent=0
    #allocation5 [shape = 'u8[1024]{0}', space=vmem, size = 0x400, scoped, tag = 'output window, operand 0, single buffered']
    #allocation6 [shape = 's32[1]{0}', space=sflag, size = 0x4, scoped, tag = 'scoped memory for pallas_forward.1']
    %14 = vsyncpa [#allocation6], 0
    // Predicated region
    $region2: #{pallas_forward.1} parent=1 // pred_check
      _
    $region3: #{pallas_forward.1} parent=1 // pred_check_branch
      %16 = sbr.rel (0) target = $region5
    $region4: #{pallas_forward.1} parent=1 // pred_region
      _
    $region5: #{pallas_forward.1} parent=1 // pred_fallthru
      _
    // Predicated region
    $region6: #{pallas_forward.1} parent=1 // pred_check
      _
    $region7: #{pallas_forward.1} parent=1 // pred_check_branch
      %18 = sbr.rel (0) target = $region9
    $region8: #{pallas_forward.1} parent=1 // pred_region
      _
    $region9: #{pallas_forward.1} parent=1 // pred_fallthru
      _
    // Predicated region
    $region10: #{pallas_forward.1} parent=1 // pred_check
      _
    $region11: #{pallas_forward.1} parent=1 // pred_check_branch
      %20 = sbr.rel (0) target = $region13
    $region12: #{pallas_forward.1} parent=1 // pred_region
      _
    $region13: #{pallas_forward.1} parent=1 // pred_fallthru
      _
    // Predicated region
    $region14: #{pallas_forward.1} parent=1 // pred_check
      _
    $region15: #{pallas_forward.1} parent=1 // pred_check_branch
      %22 = sbr.rel (0) target = $region17
    $region16: #{pallas_forward.1} parent=1 // pred_region
      _
    $region17: #{pallas_forward.1} parent=1 // pred_fallthru
      _
    // Predicated region
    $region18: #{pallas_forward.1} parent=1 // pred_check
      _
    $region19: #{pallas_forward.1} parent=1 // pred_check_branch
      %24 = sbr.rel (0) target = $region21
    $region20: #{pallas_forward.1} parent=1 // pred_region
      _
    $region21: #{pallas_forward.1} parent=1 // pred_fallthru
      _
    // Predicated region
    $region22: #{pallas_forward.1} parent=1 // pred_check
      _
    $region23: #{pallas_forward.1} parent=1 // pred_check_branch
      %26 = sbr.rel (0) target = $region25
    $region24: #{pallas_forward.1} parent=1 // pred_region
      _
    $region25: #{pallas_forward.1} parent=1 // pred_fallthru
      _
    // Predicated region
    $region26: #{pallas_forward.1} parent=1 // pred_check
      _
    $region27: #{pallas_forward.1} parent=1 // pred_check_branch
      %28 = sbr.rel (0) target = $region29
    $region28: #{pallas_forward.1} parent=1 // pred_region
      _
    $region29: #{pallas_forward.1} parent=1 // pred_fallthru
      _
    // Predicated region
    $region30: #{pallas_forward.1} parent=1 // pred_check
      _
    $region31: #{pallas_forward.1} parent=1 // pred_check_branch
      %30 = sbr.rel (0) target = $region33
    $region32: #{pallas_forward.1} parent=1 // pred_region
      _
    $region33: #{pallas_forward.1} parent=1 // pred_fallthru
      _
    // Predicated region
    $region34: #{pallas_forward.1} parent=1 // pred_check
      _
    $region35: #{pallas_forward.1} parent=1 // pred_check_branch
      %32 = sbr.rel (0) target = $region37
    $region36: #{pallas_forward.1} parent=1 // pred_region
      _
    $region37: #{pallas_forward.1} parent=1 // pred_fallthru
      _
    %vm33 = vcmask 516096
    %34 = vst.msk [vmem:[#allocation2] sm:$0x1] %vm33, 0.0
    %vm35 = vcmask 517120
    %36 = vst.msk [vmem:[#allocation2 + $0x11] sm:$0x3] %vm35, 0.0
    %37 = vst.msk [vmem:[#allocation2 + $0x23] sm:$0x1] %vm33, 0.0
    %38 = vst [vmem:[#allocation3] sm:$0x1] 0.0
    %39 = vst [vmem:[#allocation3 + $0x11] sm:$0x3] 0.0
    %40 = vst [vmem:[#allocation3 + $0x23] sm:$0x1] 0.0
    %41 = vst.msk [vmem:[#allocation4] sm:$0x1] %vm33, 0.0
    %42 = vst.msk [vmem:[#allocation4 + $0x9] sm:$0x3] %vm35, 0.0
    %43 = vst.msk [vmem:[#allocation4 + $0x13] sm:$0x1] %vm33, 0.0
    %v44 = vld [vmem:[%s0] sm:$0xff]
    %v45 = vld [vmem:[%s0 + $0x8] sm:$0xff]
    %vm46 = vcmask 130048
    %47 = vst.msk [vmem:[#allocation2 + $0x1] sm:$0xff] %vm46, %v44
    %48 = vst.msk [vmem:[#allocation2 + $0x9] sm:$0xff] %vm46, %v45
    %s49 = scalar_lea.vmem %s0, 16
    %v50 = vld [vmem:[%s49] sm:$0xff]
    %v51 = vld [vmem:[%s49 + $0x8] sm:$0xff]
    %54 = vrot.lane.b32.xlu0 %v50, 16
    %v55 = vpop.permute.xlu0 %54
    %56 = vrot.lane.b32.xlu0 %v51, 16
    %v57 = vpop.permute.xlu0 %56
    %vm60 = vcmask 261248
    %61 = vst.msk [vmem:[#allocation2 + $0x1] sm:$0xff] %vm60, %v55
    %62 = vst.msk [vmem:[#allocation2 + $0x9] sm:$0xff] %vm60, %v57
    %s63 = scalar_lea.vmem %s0, 32
    %v64 = vld [vmem:[%s63] sm:$0xff]
    %v65 = vld [vmem:[%s63 + $0x8] sm:$0xff]
    %68 = vrot.lane.b32.xlu0 %v64, 32
    %v69 = vpop.permute.xlu0 %68
    %70 = vrot.lane.b32.xlu0 %v65, 32
    %v71 = vpop.permute.xlu0 %70
    %vm74 = vcmask 392448
    %75 = vst.msk [vmem:[#allocation2 + $0x1] sm:$0xff] %vm74, %v69
    %76 = vst.msk [vmem:[#allocation2 + $0x9] sm:$0xff] %vm74, %v71
    %s77 = scalar_lea.vmem %s0, 48
    %v78 = vld [vmem:[%s77] sm:$0xff]
    %v79 = vld [vmem:[%s77 + $0x8] sm:$0xff]
    %82 = vrot.lane.b32.xlu0 %v78, 48
    %v83 = vpop.permute.xlu0 %82
    %84 = vrot.lane.b32.xlu0 %v79, 48
    %v85 = vpop.permute.xlu0 %84
    %vm88 = vcmask 523648
    %89 = vst.msk [vmem:[#allocation2 + $0x1] sm:$0xff] %vm88, %v83
    %90 = vst.msk [vmem:[#allocation2 + $0x9] sm:$0xff] %vm88, %v85
    %s91 = scalar_lea.vmem %s0, 64
    %v92 = vld [vmem:[%s91] sm:$0xff]
    %v93 = vld [vmem:[%s91 + $0x8] sm:$0xff]
    %94 = vst.msk [vmem:[#allocation2 + $0x13] sm:$0xff] %vm46, %v92
    %95 = vst.msk [vmem:[#allocation2 + $0x1b] sm:$0xff] %vm46, %v93
    %s96 = scalar_lea.vmem %s0, 80
    %v97 = vld [vmem:[%s96] sm:$0xff]
    %v98 = vld [vmem:[%s96 + $0x8] sm:$0xff]
    %101 = vrot.lane.b32.xlu0 %v97, 16
    %v102 = vpop.permute.xlu0 %101
    %103 = vrot.lane.b32.xlu0 %v98, 16
    %v104 = vpop.permute.xlu0 %103
    %107 = vst.msk [vmem:[#allocation2 + $0x13] sm:$0xff] %vm60, %v102
    %108 = vst.msk [vmem:[#allocation2 + $0x1b] sm:$0xff] %vm60, %v104
    %s109 = scalar_lea.vmem %s0, 96
    %v110 = vld [vmem:[%s109] sm:$0xff]
    %v111 = vld [vmem:[%s109 + $0x8] sm:$0xff]
    %114 = vrot.lane.b32.xlu0 %v110, 32
    %v115 = vpop.permute.xlu0 %114
    %116 = vrot.lane.b32.xlu0 %v111, 32
    %v117 = vpop.permute.xlu0 %116
    %120 = vst.msk [vmem:[#allocation2 + $0x13] sm:$0xff] %vm74, %v115
    %121 = vst.msk [vmem:[#allocation2 + $0x1b] sm:$0xff] %vm74, %v117
    %s122 = scalar_lea.vmem %s0, 112
    %v123 = vld [vmem:[%s122] sm:$0xff]
    %v124 = vld [vmem:[%s122 + $0x8] sm:$0xff]
    %127 = vrot.lane.b32.xlu0 %v123, 48
    %v128 = vpop.permute.xlu0 %127
    %129 = vrot.lane.b32.xlu0 %v124, 48
    %v130 = vpop.permute.xlu0 %129
    %133 = vst.msk [vmem:[#allocation2 + $0x13] sm:$0xff] %vm88, %v128
    %134 = vst.msk [vmem:[#allocation2 + $0x1b] sm:$0xff] %vm88, %v130
    %v135 = vld [vmem:[#allocation2] sm:$0xff]
    %v136 = vld [vmem:[#allocation2 + $0x8] sm:$0xff]
    %v137 = vld [vmem:[#allocation2 + $0x10] sm:$0xff]
    %v138 = vld [vmem:[#allocation2 + $0x18] sm:$0xff]
    %v139 = vld [vmem:[#allocation2 + $0x20] sm:$0xf]
    %v140 = vld [vmem:[%s1] sm:$0xff]
    %v141 = vld [vmem:[%s1 + $0x8] sm:$0xff]
    %v142 = vld [vmem:[%s1 + $0x10] sm:$0xff]
    %v143 = vld [vmem:[%s1 + $0x18] sm:$0xff]
    %v144 = vld [vmem:[%s1 + $0x20] sm:$0xff]
    %v145 = vld [vmem:[%s1 + $0x28] sm:$0xff]
    %v146 = vld [vmem:[%s1 + $0x30] sm:$0xff]
    %v147 = vld [vmem:[%s1 + $0x38] sm:$0xff]
    %v148 = vld [vmem:[%s1 + $0x40] sm:$0xff]
    %v149 = vld [vmem:[%s1 + $0x48] sm:$0xff]
    %v150 = vld [vmem:[%s1 + $0x50] sm:$0xff]
    %v151 = vld [vmem:[%s1 + $0x58] sm:$0xff]
    %v152 = vld [vmem:[%s1 + $0x60] sm:$0xff]
    %v153 = vld [vmem:[%s1 + $0x68] sm:$0xff]
    %v154 = vld [vmem:[%s1 + $0x70] sm:$0xff]
    %v155 = vld [vmem:[%s1 + $0x78] sm:$0xff]
    %v156 = vld [vmem:[%s1 + $0x80] sm:$0xff]
    %v157 = vld [vmem:[%s1 + $0x88] sm:$0xff]
    %v158 = vld [vmem:[%s1 + $0x90] sm:$0xff]
    %v159 = vld [vmem:[%s1 + $0x98] sm:$0xff]
    %v160 = vld [vmem:[%s1 + $0xa0] sm:$0xff]
    %v161 = vld [vmem:[%s1 + $0xa8] sm:$0xff]
    %v162 = vld [vmem:[%s1 + $0xb0] sm:$0xff]
    %v163 = vld [vmem:[%s1 + $0xb8] sm:$0xff]
    %vm164 = vcmask 523264
    %v166 = vsel %vm164, %v135, 0
    %v169 = vsel %vm164, %v136, 0
    %v172 = vsel %vm164, %v137, 0
    %v175 = vsel %vm164, %v138, 0
    %v178 = vsel %vm164, %v139, 0
    %180 = vmatprep.subr.mxu0 %v141
    %181 = vmatpush1.msra.mxu0 %v140
    %182 = vmatprep.subr.mxu0 %v144
    %183 = vmatpush1.msra.mxu0 %v143
    %184 = vmatprep.subr.mxu0 %v147
    %185 = vmatpush1.msra.mxu0 %v146
    %186 = vmatprep.subr.mxu0 %v150
    %187 = vmatpush1.msra.mxu0 %v149
    %188 = vmatprep.subr.mxu0 %v153
    %189 = vmatpush1.msra.mxu0 %v152
    %190 = vmatprep.subr.mxu0 %v156
    %191 = vmatpush1.msra.mxu0 %v155
    %192 = vmatprep.subr.mxu0 %v159
    %193 = vmatpush1.msra.mxu0 %v158
    %194 = vmatprep.subr.mxu0 %v162
    %195 = vmatpush1.msra.mxu0 %v161
    %196 = vmatprep.subr.mxu0 0.0
    %197 = vmatpush1.msra.mxu0 0.0
    %198 = vmatprep.subr.mxu0 0.0
    %199 = vmatpush1.msra.mxu0 0.0
    %200 = vmatprep.subr.mxu0 0.0
    %201 = vmatpush1.msra.mxu0 0.0
    %202 = vmatprep.subr.mxu0 0.0
    %203 = vmatpush1.msra.mxu0 0.0
    %204 = vmatprep.subr.mxu0 0.0
    %205 = vmatpush1.msra.mxu0 0.0
    %206 = vmatprep.subr.mxu0 0.0
    %207 = vmatpush1.msra.mxu0 0.0
    %208 = vmatprep.subr.mxu0 0.0
    %209 = vmatpush1.msra.mxu0 0.0
    %210 = vmatprep.subr.mxu0 0.0
    %211 = vmatpush1.msra.mxu0 0.0
    %212 = vmatprep.subr.mxu0 0.0
    %213 = vmatpush1.msra.mxu0 0.0
    %214 = vmatprep.subr.mxu0 0.0
    %215 = vmatpush1.msra.mxu0 0.0
    %216 = vmatprep.subr.mxu0 0.0
    %217 = vmatpush1.msra.mxu0 0.0
    %218 = vmatprep.subr.mxu0 0.0
    %219 = vmatpush1.msra.mxu0 0.0
    %220 = vmatprep.subr.mxu0 0.0
    %221 = vmatpush1.msra.mxu0 0.0
    %222 = vmatprep.subr.mxu0 0.0
    %223 = vmatpush1.msra.mxu0 0.0
    %224 = vmatprep.subr.mxu0 0.0
    %225 = vmatpush1.msra.mxu0 0.0
    %226 = vmatprep.subr.mxu0 0.0
    %227 = vmatpush1.msra.mxu0 0.0
    %228 = vmatprep.subr.mxu0 0.0
    %229 = vmatpush1.msra.mxu0 0.0
    %230 = vmatprep.subr.mxu0 0.0
    %231 = vmatpush1.msra.mxu0 0.0
    %232 = vmatprep.subr.mxu0 0.0
    %233 = vmatpush1.msra.mxu0 0.0
    %234 = vmatprep.subr.mxu0 0.0
    %235 = vmatpush1.msra.mxu0 0.0
    %236 = vmatprep.subr.mxu0 0.0
    %237 = vmatpush1.msra.mxu0 0.0
    %238 = vmatprep.subr.mxu0 0.0
    %239 = vmatpush1.msra.mxu0 0.0
    %240 = vmatprep.subr.mxu0 0.0
    %241 = vmatpush1.msra.mxu0 0.0
    %242 = vmatprep.subr.mxu0 0.0
    %243 = vmatpush1.msra.mxu0 0.0
    %244 = vmatprep.mubr.f32.mxu0 0.0
    %245 = vmatmul.mubr.f32.gmra.mrb[0].mxu0 %v166
    %v246 = vpop.f32.mrb[0].mxu0
    %v247 = vadd.f32 0.0, %v246
    %v248 = vpop.f32.mrb[0].mxu0
    %v249 = vadd.f32 0.0, %v248
    %250 = vmatprep.mubr.f32.mxu0 0.0
    %251 = vmatmul.mubr.f32.gmra.mrb[0].mxu0 %v169
    %v252 = vpop.f32.mrb[0].mxu0
    %v253 = vadd.f32 0.0, %v252
    %v254 = vpop.f32.mrb[0].mxu0
    %v255 = vadd.f32 0.0, %v254
    %256 = vmatprep.mubr.f32.mxu0 0.0
    %257 = vmatmul.mubr.f32.gmra.mrb[0].mxu0 %v172
    %v258 = vpop.f32.mrb[0].mxu0
    %v259 = vadd.f32 0.0, %v258
    %v260 = vpop.f32.mrb[0].mxu0
    %v261 = vadd.f32 0.0, %v260
    %262 = vmatprep.mubr.f32.mxu0 0.0
    %263 = vmatmul.mubr.f32.gmra.mrb[0].mxu0 %v175
    %v264 = vpop.f32.mrb[0].mxu0
    %v265 = vadd.f32 0.0, %v264
    %v266 = vpop.f32.mrb[0].mxu0
    %v267 = vadd.f32 0.0, %v266
    %268 = vmatprep.mubr.f32.mxu0 0.0
    %269 = vmatmul.mubr.f32.gmra.mrb[0].mxu0 %v178
    %v270 = vpop.f32.mrb[0].mxu0
    %v271 = vadd.f32 0.0, %v270
    %v272 = vpop.f32.mrb[0].mxu0
    %v273 = vadd.f32 0.0, %v272
    %274 = vdwg.mxu0
    %275 = vmatprep.subr.mxu0 0.0
    %276 = vmatpush1.msra.mxu0 %v142
    %277 = vmatprep.subr.mxu0 0.0
    %278 = vmatpush1.msra.mxu0 %v145
    %279 = vmatprep.subr.mxu0 0.0
    %280 = vmatpush1.msra.mxu0 %v148
    %281 = vmatprep.subr.mxu0 0.0
    %282 = vmatpush1.msra.mxu0 %v151
    %283 = vmatprep.subr.mxu0 0.0
    %284 = vmatpush1.msra.mxu0 %v154
    %285 = vmatprep.subr.mxu0 0.0
    %286 = vmatpush1.msra.mxu0 %v157
    %287 = vmatprep.subr.mxu0 0.0
    %288 = vmatpush1.msra.mxu0 %v160
    %289 = vmatprep.subr.mxu0 0.0
    %290 = vmatpush1.msra.mxu0 %v163
    %291 = vmatprep.subr.mxu0 0.0
    %292 = vmatpush1.msra.mxu0 0.0
    %293 = vmatprep.subr.mxu0 0.0
    %294 = vmatpush1.msra.mxu0 0.0
    %295 = vmatprep.subr.mxu0 0.0
    %296 = vmatpush1.msra.mxu0 0.0
    %297 = vmatprep.subr.mxu0 0.0
    %298 = vmatpush1.msra.mxu0 0.0
    %299 = vmatprep.subr.mxu0 0.0
    %300 = vmatpush1.msra.mxu0 0.0
    %301 = vmatprep.subr.mxu0 0.0
    %302 = vmatpush1.msra.mxu0 0.0
    %303 = vmatprep.subr.mxu0 0.0
    %304 = vmatpush1.msra.mxu0 0.0
    %305 = vmatprep.subr.mxu0 0.0
    %306 = vmatpush1.msra.mxu0 0.0
    %307 = vmatprep.subr.mxu0 0.0
    %308 = vmatpush1.msra.mxu0 0.0
    %309 = vmatprep.subr.mxu0 0.0
    %310 = vmatpush1.msra.mxu0 0.0
    %311 = vmatprep.subr.mxu0 0.0
    %312 = vmatpush1.msra.mxu0 0.0
    %313 = vmatprep.subr.mxu0 0.0
    %314 = vmatpush1.msra.mxu0 0.0
    %315 = vmatprep.subr.mxu0 0.0
    %316 = vmatpush1.msra.mxu0 0.0
    %317 = vmatprep.subr.mxu0 0.0
    %318 = vmatpush1.msra.mxu0 0.0
    %319 = vmatprep.subr.mxu0 0.0
    %320 = vmatpush1.msra.mxu0 0.0
    %321 = vmatprep.subr.mxu0 0.0
    %322 = vmatpush1.msra.mxu0 0.0
    %323 = vmatprep.subr.mxu0 0.0
    %324 = vmatpush1.msra.mxu0 0.0
    %325 = vmatprep.subr.mxu0 0.0
    %326 = vmatpush1.msra.mxu0 0.0
    %327 = vmatprep.subr.mxu0 0.0
    %328 = vmatpush1.msra.mxu0 0.0
    %329 = vmatprep.subr.mxu0 0.0
    %330 = vmatpush1.msra.mxu0 0.0
    %331 = vmatprep.subr.mxu0 0.0
    %332 = vmatpush1.msra.mxu0 0.0
    %333 = vmatprep.subr.mxu0 0.0
    %334 = vmatpush1.msra.mxu0 0.0
    %335 = vmatprep.subr.mxu0 0.0
    %336 = vmatpush1.msra.mxu0 0.0
    %337 = vmatprep.subr.mxu0 0.0
    %338 = vmatpush1.msra.mxu0 0.0
    %339 = vmatprep.mubr.f32.mxu0 0.0
    %340 = vmatmul.mubr.f32.gmra.mrb[0].mxu0 %v166
    %v341 = vpop.f32.mrb[0].mxu0
    %v342 = vadd.f32 0.0, %v341
    %v343 = vpop.f32.mrb[0].mxu0
    %344 = vmatprep.mubr.f32.mxu0 0.0
    %345 = vmatmul.mubr.f32.gmra.mrb[0].mxu0 %v169
    %v346 = vpop.f32.mrb[0].mxu0
    %v347 = vadd.f32 0.0, %v346
    %v348 = vpop.f32.mrb[0].mxu0
    %349 = vmatprep.mubr.f32.mxu0 0.0
    %350 = vmatmul.mubr.f32.gmra.mrb[0].mxu0 %v172
    %v351 = vpop.f32.mrb[0].mxu0
    %v352 = vadd.f32 0.0, %v351
    %v353 = vpop.f32.mrb[0].mxu0
    %354 = vmatprep.mubr.f32.mxu0 0.0
    %355 = vmatmul.mubr.f32.gmra.mrb[0].mxu0 %v175
    %v356 = vpop.f32.mrb[0].mxu0
    %v357 = vadd.f32 0.0, %v356
    %v358 = vpop.f32.mrb[0].mxu0
    %359 = vmatprep.mubr.f32.mxu0 0.0
    %360 = vmatmul.mubr.f32.gmra.mrb[0].mxu0 %v178
    %v361 = vpop.f32.mrb[0].mxu0
    %v362 = vadd.f32 0.0, %v361
    %v363 = vpop.f32.mrb[0].mxu0
    %364 = vdwg.mxu0
    %vm370 = vcmask 1046528
    %v371 = vrot.slane %v249, 1
    %v372 = vrot.slane %v255, 1
    %v373 = vsel %vm370, %v371, %v372
    %v374 = vrot.slane %v261, 1
    %v375 = vsel %vm370, %v372, %v374
    %v376 = vrot.slane %v267, 1
    %v377 = vsel %vm370, %v374, %v376
    %v378 = vrot.slane %v273, 1
    %v379 = vsel %vm370, %v376, %v378
    %v385 = vadd.f32 %v247, %v373
    %v386 = vadd.f32 %v253, %v375
    %v387 = vadd.f32 %v259, %v377
    %v388 = vadd.f32 %v265, %v379
    %v389 = vadd.f32 %v271, %v378
    %vm395 = vcmask 1045504
    %v396 = vrot.slane %v342, 2
    %v397 = vrot.slane %v347, 2
    %v398 = vsel %vm395, %v396, %v397
    %v399 = vrot.slane %v352, 2
    %v400 = vsel %vm395, %v397, %v399
    %v401 = vrot.slane %v357, 2
    %v402 = vsel %vm395, %v399, %v401
    %v403 = vrot.slane %v362, 2
    %v404 = vsel %vm395, %v401, %v403
    %v410 = vadd.f32 %v385, %v398
    %v411 = vadd.f32 %v386, %v400
    %v412 = vadd.f32 %v387, %v402
    %v413 = vadd.f32 %v388, %v404
    %v414 = vadd.f32 %v389, %v403
    %v415 = vmax.f32 %v410, 0.0
    %v416 = vmax.f32 %v411, 0.0
    %417 = vst [vmem:[#allocation3 + $0x1] sm:$0xff] %v415
    %418 = vst [vmem:[#allocation3 + $0x9] sm:$0xff] %v416
    %v419 = vmax.f32 %v412, 0.0
    %v420 = vmax.f32 %v413, 0.0
    %v421 = vmax.f32 %v414, 0.0
    %422 = vst [vmem:[#allocation3 + $0x11] sm:$0xfc] %v419
    %423 = vst [vmem:[#allocation3 + $0x19] sm:$0xff] %v420
    %424 = vst [vmem:[#allocation3 + $0x21] sm:$0x3] %v421
    %v425 = vld [vmem:[#allocation3] sm:$0xff]
    %v426 = vld [vmem:[#allocation3 + $0x8] sm:$0xff]
    %v427 = vld [vmem:[#allocation3 + $0x10] sm:$0xff]
    %v428 = vld [vmem:[#allocation3 + $0x18] sm:$0xff]
    %v429 = vld [vmem:[#allocation3 + $0x20] sm:$0xf]
    %v430 = vld [vmem:[%s2] sm:$0xff]
    %v431 = vld [vmem:[%s2 + $0x8] sm:$0xff]
    %v432 = vld [vmem:[%s2 + $0x10] sm:$0xff]
    %v433 = vld [vmem:[%s2 + $0x18] sm:$0xff]
    %v434 = vld [vmem:[%s2 + $0x20] sm:$0xff]
    %v435 = vld [vmem:[%s2 + $0x28] sm:$0xff]
    %v436 = vld [vmem:[%s2 + $0x30] sm:$0xff]
    %v437 = vld [vmem:[%s2 + $0x38] sm:$0xff]
    %v438 = vld [vmem:[%s2 + $0x40] sm:$0xff]
    %v439 = vld [vmem:[%s2 + $0x48] sm:$0xff]
    %v440 = vld [vmem:[%s2 + $0x50] sm:$0xff]
    %v441 = vld [vmem:[%s2 + $0x58] sm:$0xff]
    %v442 = vld [vmem:[%s2 + $0x60] sm:$0xff]
    %v443 = vld [vmem:[%s2 + $0x68] sm:$0xff]
    %v444 = vld [vmem:[%s2 + $0x70] sm:$0xff]
    %v445 = vld [vmem:[%s2 + $0x78] sm:$0xff]
    %v446 = vld [vmem:[%s2 + $0x80] sm:$0xff]
    %v447 = vld [vmem:[%s2 + $0x88] sm:$0xff]
    %v448 = vld [vmem:[%s2 + $0x90] sm:$0xff]
    %v449 = vld [vmem:[%s2 + $0x98] sm:$0xff]
    %v450 = vld [vmem:[%s2 + $0xa0] sm:$0xff]
    %v451 = vld [vmem:[%s2 + $0xa8] sm:$0xff]
    %v452 = vld [vmem:[%s2 + $0xb0] sm:$0xff]
    %v453 = vld [vmem:[%s2 + $0xb8] sm:$0xff]
    %v454 = vld [vmem:[%s2 + $0xc0] sm:$0xff]
    %v455 = vld [vmem:[%s2 + $0xc8] sm:$0xff]
    %v456 = vld [vmem:[%s2 + $0xd0] sm:$0xff]
    %v457 = vld [vmem:[%s2 + $0xd8] sm:$0xff]
    %v458 = vld [vmem:[%s2 + $0xe0] sm:$0xff]
    %v459 = vld [vmem:[%s2 + $0xe8] sm:$0xff]
    %v460 = vld [vmem:[%s2 + $0xf0] sm:$0xff]
    %v461 = vld [vmem:[%s2 + $0xf8] sm:$0xff]
    %462 = vmatprep.subr.mxu0 %v431
    %463 = vmatpush1.msra.mxu0 %v430
    %464 = vmatprep.subr.mxu0 %v433
    %465 = vmatpush1.msra.mxu0 %v432
    %466 = vmatprep.subr.mxu0 %v435
    %467 = vmatpush1.msra.mxu0 %v434
    %468 = vmatprep.subr.mxu0 %v437
    %469 = vmatpush1.msra.mxu0 %v436
    %470 = vmatprep.subr.mxu0 %v439
    %471 = vmatpush1.msra.mxu0 %v438
    %472 = vmatprep.subr.mxu0 %v441
    %473 = vmatpush1.msra.mxu0 %v440
    %474 = vmatprep.subr.mxu0 %v443
    %475 = vmatpush1.msra.mxu0 %v442
    %476 = vmatprep.subr.mxu0 %v445
    %477 = vmatpush1.msra.mxu0 %v444
    %478 = vmatprep.subr.mxu0 %v447
    %479 = vmatpush1.msra.mxu0 %v446
    %480 = vmatprep.subr.mxu0 %v449
    %481 = vmatpush1.msra.mxu0 %v448
    %482 = vmatprep.subr.mxu0 %v451
    %483 = vmatpush1.msra.mxu0 %v450
    %484 = vmatprep.subr.mxu0 %v453
    %485 = vmatpush1.msra.mxu0 %v452
    %486 = vmatprep.subr.mxu0 %v455
    %487 = vmatpush1.msra.mxu0 %v454
    %488 = vmatprep.subr.mxu0 %v457
    %489 = vmatpush1.msra.mxu0 %v456
    %490 = vmatprep.subr.mxu0 %v459
    %491 = vmatpush1.msra.mxu0 %v458
    %492 = vmatprep.subr.mxu0 %v461
    %493 = vmatpush1.msra.mxu0 %v460
    %494 = vmatprep.subr.mxu0 0.0
    %495 = vmatpush1.msra.mxu0 0.0
    %496 = vmatprep.subr.mxu0 0.0
    %497 = vmatpush1.msra.mxu0 0.0
    %498 = vmatprep.subr.mxu0 0.0
    %499 = vmatpush1.msra.mxu0 0.0
    %500 = vmatprep.subr.mxu0 0.0
    %501 = vmatpush1.msra.mxu0 0.0
    %502 = vmatprep.subr.mxu0 0.0
    %503 = vmatpush1.msra.mxu0 0.0
    %504 = vmatprep.subr.mxu0 0.0
    %505 = vmatpush1.msra.mxu0 0.0
    %506 = vmatprep.subr.mxu0 0.0
    %507 = vmatpush1.msra.mxu0 0.0
    %508 = vmatprep.subr.mxu0 0.0
    %509 = vmatpush1.msra.mxu0 0.0
    %510 = vmatprep.subr.mxu0 0.0
    %511 = vmatpush1.msra.mxu0 0.0
    %512 = vmatprep.subr.mxu0 0.0
    %513 = vmatpush1.msra.mxu0 0.0
    %514 = vmatprep.subr.mxu0 0.0
    %515 = vmatpush1.msra.mxu0 0.0
    %516 = vmatprep.subr.mxu0 0.0
    %517 = vmatpush1.msra.mxu0 0.0
    %518 = vmatprep.subr.mxu0 0.0
    %519 = vmatpush1.msra.mxu0 0.0
    %520 = vmatprep.subr.mxu0 0.0
    %521 = vmatpush1.msra.mxu0 0.0
    %522 = vmatprep.subr.mxu0 0.0
    %523 = vmatpush1.msra.mxu0 0.0
    %524 = vmatprep.subr.mxu0 0.0
    %525 = vmatpush1.msra.mxu0 0.0
    %526 = vmatprep.mubr.f32.mxu0 0.0
    %527 = vmatmul.mubr.f32.gmra.mrb[0].mxu0 %v425
    %v528 = vpop.f32.mrb[0].mxu0
    %v529 = vadd.f32 0.0, %v528
    %v530 = vpop.f32.mrb[0].mxu0
    %v531 = vadd.f32 0.0, %v530
    %532 = vmatprep.mubr.f32.mxu0 0.0
    %533 = vmatmul.mubr.f32.gmra.mrb[0].mxu0 %v426
    %v534 = vpop.f32.mrb[0].mxu0
    %v535 = vadd.f32 0.0, %v534
    %v536 = vpop.f32.mrb[0].mxu0
    %v537 = vadd.f32 0.0, %v536
    %538 = vmatprep.mubr.f32.mxu0 0.0
    %539 = vmatmul.mubr.f32.gmra.mrb[0].mxu0 %v427
    %v540 = vpop.f32.mrb[0].mxu0
    %v541 = vadd.f32 0.0, %v540
    %v542 = vpop.f32.mrb[0].mxu0
    %v543 = vadd.f32 0.0, %v542
    %544 = vmatprep.mubr.f32.mxu0 0.0
    %545 = vmatmul.mubr.f32.gmra.mrb[0].mxu0 %v428
    %v546 = vpop.f32.mrb[0].mxu0
    %v547 = vadd.f32 0.0, %v546
    %v548 = vpop.f32.mrb[0].mxu0
    %v549 = vadd.f32 0.0, %v548
    %550 = vmatprep.mubr.f32.mxu0 0.0
    %551 = vmatmul.mubr.f32.gmra.mrb[0].mxu0 %v429
    %v552 = vpop.f32.mrb[0].mxu0
    %v553 = vadd.f32 0.0, %v552
    %v554 = vpop.f32.mrb[0].mxu0
    %v555 = vadd.f32 0.0, %v554
    %556 = vdwg.mxu0
    %v562 = vrot.slane %v529, 1
    %v563 = vrot.slane %v535, 1
    %v564 = vsel %vm370, %v562, %v563
    %v565 = vrot.slane %v541, 1
    %v566 = vsel %vm370, %v563, %v565
    %v567 = vrot.slane %v547, 1
    %v568 = vsel %vm370, %v565, %v567
    %v569 = vrot.slane %v553, 1
    %v570 = vsel %vm370, %v567, %v569
    %571 = vrot.lane.b32.xlu0 %v564, 64
    %v572 = vpop.permute.xlu0 %571
    %573 = vrot.lane.b32.xlu0 %v566, 64
    %v574 = vpop.permute.xlu0 %573
    %575 = vrot.lane.b32.xlu0 %v568, 64
    %v576 = vpop.permute.xlu0 %575
    %577 = vrot.lane.b32.xlu0 %v570, 64
    %v578 = vpop.permute.xlu0 %577
    %579 = vrot.lane.b32.xlu0 %v569, 64
    %v580 = vpop.permute.xlu0 %579
    %v586 = vadd.f32 %v529, %v572
    %v587 = vadd.f32 %v535, %v574
    %v588 = vadd.f32 %v541, %v576
    %v589 = vadd.f32 %v547, %v578
    %v590 = vadd.f32 %v553, %v580
    %v596 = vrot.slane %v531, 2
    %v597 = vrot.slane %v537, 2
    %v598 = vsel %vm395, %v596, %v597
    %v599 = vrot.slane %v543, 2
    %v600 = vsel %vm395, %v597, %v599
    %v601 = vrot.slane %v549, 2
    %v602 = vsel %vm395, %v599, %v601
    %v603 = vrot.slane %v555, 2
    %v604 = vsel %vm395, %v601, %v603
    %v610 = vadd.f32 %v586, %v598
    %v611 = vadd.f32 %v587, %v600
    %v612 = vadd.f32 %v588, %v602
    %v613 = vadd.f32 %v589, %v604
    %v614 = vadd.f32 %v590, %v603
    %v615 = vld [vmem:[%s5] sm:$0xff]
    %v616 = vld [vmem:[%s5 + $0x8] sm:$0xff]
    %v617 = vld [vmem:[%s5 + $0x10] sm:$0xf]
    %vm618 = vcmask 277504
    %v620 = vsel %vm618, %v615, 0
    %v623 = vsel %vm618, %v616, 0
    %v626 = vsel %vm618, %v617, 0
    %vm628 = vcmask 1041408
    %v630 = vsel %vm628, %v614, 0
    %632 = vmatprep.subr.mxu0 0.0
    %633 = vmatpush1.msra.mxu0 %v610
    %634 = vmatprep.subr.mxu0 0.0
    %635 = vmatpush1.msra.mxu0 %v611
    %636 = vmatprep.subr.mxu0 0.0
    %637 = vmatpush1.msra.mxu0 %v612
    %638 = vmatprep.subr.mxu0 0.0
    %639 = vmatpush1.msra.mxu0 %v613
    %640 = vmatprep.subr.mxu0 0.0
    %641 = vmatpush1.msra.mxu0 %v630
    %642 = vmatprep.subr.mxu0 0.0
    %643 = vmatpush1.msra.mxu0 0.0
    %644 = vmatprep.subr.mxu0 0.0
    %645 = vmatpush1.msra.mxu0 0.0
    %646 = vmatprep.subr.mxu0 0.0
    %647 = vmatpush1.msra.mxu0 0.0
    %648 = vmatprep.subr.mxu0 0.0
    %649 = vmatpush1.msra.mxu0 0.0
    %650 = vmatprep.subr.mxu0 0.0
    %651 = vmatpush1.msra.mxu0 0.0
    %652 = vmatprep.subr.mxu0 0.0
    %653 = vmatpush1.msra.mxu0 0.0
    %654 = vmatprep.subr.mxu0 0.0
    %655 = vmatpush1.msra.mxu0 0.0
    %656 = vmatprep.subr.mxu0 0.0
    %657 = vmatpush1.msra.mxu0 0.0
    %658 = vmatprep.subr.mxu0 0.0
    %659 = vmatpush1.msra.mxu0 0.0
    %660 = vmatprep.subr.mxu0 0.0
    %661 = vmatpush1.msra.mxu0 0.0
    %662 = vmatprep.subr.mxu0 0.0
    %663 = vmatpush1.msra.mxu0 0.0
    %664 = vmatprep.subr.mxu0 0.0
    %665 = vmatpush1.msra.mxu0 0.0
    %666 = vmatprep.subr.mxu0 0.0
    %667 = vmatpush1.msra.mxu0 0.0
    %668 = vmatprep.subr.mxu0 0.0
    %669 = vmatpush1.msra.mxu0 0.0
    %670 = vmatprep.subr.mxu0 0.0
    %671 = vmatpush1.msra.mxu0 0.0
    %672 = vmatprep.subr.mxu0 0.0
    %673 = vmatpush1.msra.mxu0 0.0
    %674 = vmatprep.subr.mxu0 0.0
    %675 = vmatpush1.msra.mxu0 0.0
    %676 = vmatprep.subr.mxu0 0.0
    %677 = vmatpush1.msra.mxu0 0.0
    %678 = vmatprep.subr.mxu0 0.0
    %679 = vmatpush1.msra.mxu0 0.0
    %680 = vmatprep.subr.mxu0 0.0
    %681 = vmatpush1.msra.mxu0 0.0
    %682 = vmatprep.subr.mxu0 0.0
    %683 = vmatpush1.msra.mxu0 0.0
    %684 = vmatprep.subr.mxu0 0.0
    %685 = vmatpush1.msra.mxu0 0.0
    %686 = vmatprep.subr.mxu0 0.0
    %687 = vmatpush1.msra.mxu0 0.0
    %688 = vmatprep.subr.mxu0 0.0
    %689 = vmatpush1.msra.mxu0 0.0
    %690 = vmatprep.subr.mxu0 0.0
    %691 = vmatpush1.msra.mxu0 0.0
    %692 = vmatprep.subr.mxu0 0.0
    %693 = vmatpush1.msra.mxu0 0.0
    %694 = vmatprep.subr.mxu0 0.0
    %695 = vmatpush1.msra.mxu0 0.0
    %696 = vmatprep.mubr.f32.mxu0 0.0
    %697 = vmatmul.mubr.f32.gmra.mrb[0].mxu0 %v620
    %v698 = vpop.f32.mrb[0].mxu0
    %v699 = vadd.f32 0.0, %v698
    %v700 = vpop.f32.mrb[0].mxu0
    %701 = vmatprep.mubr.f32.mxu0 0.0
    %702 = vmatmul.mubr.f32.gmra.mrb[0].mxu0 %v623
    %v703 = vpop.f32.mrb[0].mxu0
    %v704 = vadd.f32 0.0, %v703
    %v705 = vpop.f32.mrb[0].mxu0
    %706 = vmatprep.mubr.f32.mxu0 0.0
    %707 = vmatmul.mubr.f32.gmra.mrb[0].mxu0 %v626
    %v708 = vpop.f32.mrb[0].mxu0
    %v709 = vadd.f32 0.0, %v708
    %v710 = vpop.f32.mrb[0].mxu0
    %711 = vdwg.mxu0
    %v712 = vmax.f32 %v699, 0.0
    %v713 = vmax.f32 %v704, 0.0
    %v714 = vmax.f32 %v709, 0.0
    %v715 = vld [vmem:[%s3] sm:$0xff]
    %v716 = vld [vmem:[%s3 + $0x8] sm:$0xff]
    %v717 = vld [vmem:[%s3 + $0x10] sm:$0xff]
    %v718 = vld [vmem:[%s3 + $0x18] sm:$0xff]
    %v719 = vld [vmem:[%s3 + $0x20] sm:$0xff]
    %v720 = vld [vmem:[%s3 + $0x28] sm:$0xff]
    %v721 = vld [vmem:[%s3 + $0x30] sm:$0xff]
    %v722 = vld [vmem:[%s3 + $0x38] sm:$0xff]
    %v723 = vld [vmem:[%s3 + $0x40] sm:$0xff]
    %v724 = vld [vmem:[%s3 + $0x48] sm:$0xff]
    %v725 = vld [vmem:[%s3 + $0x50] sm:$0xff]
    %v726 = vld [vmem:[%s3 + $0x58] sm:$0xff]
    %v727 = vld [vmem:[%s3 + $0x60] sm:$0xff]
    %v728 = vld [vmem:[%s3 + $0x68] sm:$0xff]
    %v729 = vld [vmem:[%s3 + $0x70] sm:$0xff]
    %v730 = vld [vmem:[%s3 + $0x78] sm:$0xff]
    %v732 = vsel %vm164, %v712, 0
    %v735 = vsel %vm164, %v713, 0
    %v738 = vsel %vm164, %v714, 0
    %740 = vmatprep.subr.mxu0 %v716
    %741 = vmatpush1.msra.mxu0 %v715
    %742 = vmatprep.subr.mxu0 %v718
    %743 = vmatpush1.msra.mxu0 %v717
    %744 = vmatprep.subr.mxu0 %v720
    %745 = vmatpush1.msra.mxu0 %v719
    %746 = vmatprep.subr.mxu0 %v722
    %747 = vmatpush1.msra.mxu0 %v721
    %748 = vmatprep.subr.mxu0 %v724
    %749 = vmatpush1.msra.mxu0 %v723
    %750 = vmatprep.subr.mxu0 %v726
    %751 = vmatpush1.msra.mxu0 %v725
    %752 = vmatprep.subr.mxu0 %v728
    %753 = vmatpush1.msra.mxu0 %v727
    %754 = vmatprep.subr.mxu0 %v730
    %755 = vmatpush1.msra.mxu0 %v729
    %756 = vmatprep.subr.mxu0 0.0
    %757 = vmatpush1.msra.mxu0 0.0
    %758 = vmatprep.subr.mxu0 0.0
    %759 = vmatpush1.msra.mxu0 0.0
    %760 = vmatprep.subr.mxu0 0.0
    %761 = vmatpush1.msra.mxu0 0.0
    %762 = vmatprep.subr.mxu0 0.0
    %763 = vmatpush1.msra.mxu0 0.0
    %764 = vmatprep.subr.mxu0 0.0
    %765 = vmatpush1.msra.mxu0 0.0
    %766 = vmatprep.subr.mxu0 0.0
    %767 = vmatpush1.msra.mxu0 0.0
    %768 = vmatprep.subr.mxu0 0.0
    %769 = vmatpush1.msra.mxu0 0.0
    %770 = vmatprep.subr.mxu0 0.0
    %771 = vmatpush1.msra.mxu0 0.0
    %772 = vmatprep.subr.mxu0 0.0
    %773 = vmatpush1.msra.mxu0 0.0
    %774 = vmatprep.subr.mxu0 0.0
    %775 = vmatpush1.msra.mxu0 0.0
    %776 = vmatprep.subr.mxu0 0.0
    %777 = vmatpush1.msra.mxu0 0.0
    %778 = vmatprep.subr.mxu0 0.0
    %779 = vmatpush1.msra.mxu0 0.0
    %780 = vmatprep.subr.mxu0 0.0
    %781 = vmatpush1.msra.mxu0 0.0
    %782 = vmatprep.subr.mxu0 0.0
    %783 = vmatpush1.msra.mxu0 0.0
    %784 = vmatprep.subr.mxu0 0.0
    %785 = vmatpush1.msra.mxu0 0.0
    %786 = vmatprep.subr.mxu0 0.0
    %787 = vmatpush1.msra.mxu0 0.0
    %788 = vmatprep.subr.mxu0 0.0
    %789 = vmatpush1.msra.mxu0 0.0
    %790 = vmatprep.subr.mxu0 0.0
    %791 = vmatpush1.msra.mxu0 0.0
    %792 = vmatprep.subr.mxu0 0.0
    %793 = vmatpush1.msra.mxu0 0.0
    %794 = vmatprep.subr.mxu0 0.0
    %795 = vmatpush1.msra.mxu0 0.0
    %796 = vmatprep.subr.mxu0 0.0
    %797 = vmatpush1.msra.mxu0 0.0
    %798 = vmatprep.subr.mxu0 0.0
    %799 = vmatpush1.msra.mxu0 0.0
    %800 = vmatprep.subr.mxu0 0.0
    %801 = vmatpush1.msra.mxu0 0.0
    %802 = vmatprep.subr.mxu0 0.0
    %803 = vmatpush1.msra.mxu0 0.0
    %804 = vmatprep.mubr.f32.mxu0 0.0
    %805 = vmatmul.mubr.f32.gmra.mrb[0].mxu0 %v732
    %v806 = vpop.f32.mrb[0].mxu0
    %v807 = vadd.f32 0.0, %v806
    %v808 = vpop.f32.mrb[0].mxu0
    %v809 = vadd.f32 0.0, %v808
    %810 = vmatprep.mubr.f32.mxu0 0.0
    %811 = vmatmul.mubr.f32.gmra.mrb[0].mxu0 %v735
    %v812 = vpop.f32.mrb[0].mxu0
    %v813 = vadd.f32 0.0, %v812
    %v814 = vpop.f32.mrb[0].mxu0
    %v815 = vadd.f32 0.0, %v814
    %816 = vmatprep.mubr.f32.mxu0 0.0
    %817 = vmatmul.mubr.f32.gmra.mrb[0].mxu0 %v738
    %v818 = vpop.f32.mrb[0].mxu0
    %v819 = vadd.f32 0.0, %v818
    %v820 = vpop.f32.mrb[0].mxu0
    %v821 = vadd.f32 0.0, %v820
    %822 = vdwg.mxu0
    %v826 = vrot.slane %v807, 1
    %v827 = vrot.slane %v813, 1
    %v828 = vsel %vm370, %v826, %v827
    %v829 = vrot.slane %v819, 1
    %v830 = vsel %vm370, %v827, %v829
    %831 = vrot.lane.b32.xlu0 %v828, 64
    %v832 = vpop.permute.xlu0 %831
    %833 = vrot.lane.b32.xlu0 %v830, 64
    %v834 = vpop.permute.xlu0 %833
    %835 = vrot.lane.b32.xlu0 %v829, 64
    %v836 = vpop.permute.xlu0 %835
    %v840 = vadd.f32 %v807, %v832
    %v841 = vadd.f32 %v813, %v834
    %v842 = vadd.f32 %v819, %v836
    %v846 = vrot.slane %v809, 2
    %v847 = vrot.slane %v815, 2
    %v848 = vsel %vm395, %v846, %v847
    %v849 = vrot.slane %v821, 2
    %v850 = vsel %vm395, %v847, %v849
    %v854 = vadd.f32 %v840, %v848
    %v855 = vadd.f32 %v841, %v850
    %v856 = vadd.f32 %v842, %v849
    %v857 = vmax.f32 %v854, 0.0
    %858 = vst.msk [vmem:[#allocation4 + $0x1] sm:$0xff] %vm164, %v857
    %v859 = vmax.f32 %v855, 0.0
    %v860 = vmax.f32 %v856, 0.0
    %vm861 = vcmask 523266
    %862 = vst.msk [vmem:[#allocation4 + $0x9] sm:$0xfc] %vm861, %v859
    %863 = vst.msk [vmem:[#allocation4 + $0x11] sm:$0x3] %vm35, %v860
    %v864 = vld [vmem:[#allocation4] sm:$0xff]
    %v865 = vld [vmem:[#allocation4 + $0x8] sm:$0xff]
    %v866 = vld [vmem:[#allocation4 + $0x10] sm:$0xf]
    %v867 = vld [vmem:[%s4] sm:$0xff]
    %v868 = vld [vmem:[%s4 + $0x8] sm:$0xff]
    %v869 = vld [vmem:[%s4 + $0x10] sm:$0xff]
    %v870 = vld [vmem:[%s4 + $0x18] sm:$0xff]
    %v871 = vld [vmem:[%s4 + $0x20] sm:$0xff]
    %v872 = vld [vmem:[%s4 + $0x28] sm:$0xff]
    %v873 = vld [vmem:[%s4 + $0x30] sm:$0xff]
    %v874 = vld [vmem:[%s4 + $0x38] sm:$0xff]
    %v876 = vsel %vm164, %v864, 0
    %v879 = vsel %vm164, %v865, 0
    %v882 = vsel %vm164, %v866, 0
    %884 = vmatprep.subr.mxu0 0.0
    %885 = vmatpush1.msra.mxu0 %v867
    %886 = vmatprep.subr.mxu0 0.0
    %887 = vmatpush1.msra.mxu0 %v868
    %888 = vmatprep.subr.mxu0 0.0
    %889 = vmatpush1.msra.mxu0 %v869
    %890 = vmatprep.subr.mxu0 0.0
    %891 = vmatpush1.msra.mxu0 %v870
    %892 = vmatprep.subr.mxu0 0.0
    %893 = vmatpush1.msra.mxu0 %v871
    %894 = vmatprep.subr.mxu0 0.0
    %895 = vmatpush1.msra.mxu0 %v872
    %896 = vmatprep.subr.mxu0 0.0
    %897 = vmatpush1.msra.mxu0 %v873
    %898 = vmatprep.subr.mxu0 0.0
    %899 = vmatpush1.msra.mxu0 %v874
    %900 = vmatprep.subr.mxu0 0.0
    %901 = vmatpush1.msra.mxu0 0.0
    %902 = vmatprep.subr.mxu0 0.0
    %903 = vmatpush1.msra.mxu0 0.0
    %904 = vmatprep.subr.mxu0 0.0
    %905 = vmatpush1.msra.mxu0 0.0
    %906 = vmatprep.subr.mxu0 0.0
    %907 = vmatpush1.msra.mxu0 0.0
    %908 = vmatprep.subr.mxu0 0.0
    %909 = vmatpush1.msra.mxu0 0.0
    %910 = vmatprep.subr.mxu0 0.0
    %911 = vmatpush1.msra.mxu0 0.0
    %912 = vmatprep.subr.mxu0 0.0
    %913 = vmatpush1.msra.mxu0 0.0
    %914 = vmatprep.subr.mxu0 0.0
    %915 = vmatpush1.msra.mxu0 0.0
    %916 = vmatprep.subr.mxu0 0.0
    %917 = vmatpush1.msra.mxu0 0.0
    %918 = vmatprep.subr.mxu0 0.0
    %919 = vmatpush1.msra.mxu0 0.0
    %920 = vmatprep.subr.mxu0 0.0
    %921 = vmatpush1.msra.mxu0 0.0
    %922 = vmatprep.subr.mxu0 0.0
    %923 = vmatpush1.msra.mxu0 0.0
    %924 = vmatprep.subr.mxu0 0.0
    %925 = vmatpush1.msra.mxu0 0.0
    %926 = vmatprep.subr.mxu0 0.0
    %927 = vmatpush1.msra.mxu0 0.0
    %928 = vmatprep.subr.mxu0 0.0
    %929 = vmatpush1.msra.mxu0 0.0
    %930 = vmatprep.subr.mxu0 0.0
    %931 = vmatpush1.msra.mxu0 0.0
    %932 = vmatprep.subr.mxu0 0.0
    %933 = vmatpush1.msra.mxu0 0.0
    %934 = vmatprep.subr.mxu0 0.0
    %935 = vmatpush1.msra.mxu0 0.0
    %936 = vmatprep.subr.mxu0 0.0
    %937 = vmatpush1.msra.mxu0 0.0
    %938 = vmatprep.subr.mxu0 0.0
    %939 = vmatpush1.msra.mxu0 0.0
    %940 = vmatprep.subr.mxu0 0.0
    %941 = vmatpush1.msra.mxu0 0.0
    %942 = vmatprep.subr.mxu0 0.0
    %943 = vmatpush1.msra.mxu0 0.0
    %944 = vmatprep.subr.mxu0 0.0
    %945 = vmatpush1.msra.mxu0 0.0
    %946 = vmatprep.subr.mxu0 0.0
    %947 = vmatpush1.msra.mxu0 0.0
    %948 = vmatprep.mubr.f32.mxu0 0.0
    %949 = vmatmul.mubr.f32.gmra.mrb[0].mxu0 %v876
    %v950 = vpop.f32.mrb[0].mxu0
    %v951 = vadd.f32 0.0, %v950
    %v952 = vpop.f32.mrb[0].mxu0
    %953 = vmatprep.mubr.f32.mxu0 0.0
    %954 = vmatmul.mubr.f32.gmra.mrb[0].mxu0 %v879
    %v955 = vpop.f32.mrb[0].mxu0
    %v956 = vadd.f32 0.0, %v955
    %v957 = vpop.f32.mrb[0].mxu0
    %958 = vmatprep.mubr.f32.mxu0 0.0
    %959 = vmatmul.mubr.f32.gmra.mrb[0].mxu0 %v882
    %v960 = vpop.f32.mrb[0].mxu0
    %v961 = vadd.f32 0.0, %v960
    %v962 = vpop.f32.mrb[0].mxu0
    %963 = vdwg.mxu0
    %v967 = vrot.slane %v951, 1
    %v968 = vrot.slane %v956, 1
    %v969 = vsel %vm370, %v967, %v968
    %v970 = vrot.slane %v961, 1
    %v971 = vsel %vm370, %v968, %v970
    %972 = vrot.lane.b32.xlu0 %v969, 96
    %v973 = vpop.permute.xlu0 %972
    %974 = vrot.lane.b32.xlu0 %v971, 96
    %v975 = vpop.permute.xlu0 %974
    %976 = vrot.lane.b32.xlu0 %v970, 96
    %v977 = vpop.permute.xlu0 %976
    %v981 = vadd.f32 %v951, %v973
    %v982 = vadd.f32 %v956, %v975
    %v983 = vadd.f32 %v961, %v977
    %v984 = vrot.slane %v951, 2
    %v985 = vrot.slane %v956, 2
    %v986 = vsel %vm395, %v984, %v985
    %v987 = vrot.slane %v961, 2
    %v988 = vsel %vm395, %v985, %v987
    %989 = vrot.lane.b32.xlu0 %v986, 64
    %v990 = vpop.permute.xlu0 %989
    %991 = vrot.lane.b32.xlu0 %v988, 64
    %v992 = vpop.permute.xlu0 %991
    %993 = vrot.lane.b32.xlu0 %v987, 64
    %v994 = vpop.permute.xlu0 %993
    %v998 = vadd.f32 %v981, %v990
    %v999 = vadd.f32 %v982, %v992
    %v1000 = vadd.f32 %v983, %v994
    %v1001 = vld [vmem:[%s6] sm:$0xff]
    %vm1002 = vcmask 146432
    %v1004 = vsel %vm1002, %v1001, 0
    %v1007 = vsel %vm628, %v1000, 0
    %1009 = vmatprep.subr.mxu0 0.0
    %1010 = vmatpush1.msra.mxu0 %v998
    %1011 = vmatprep.subr.mxu0 0.0
    %1012 = vmatpush1.msra.mxu0 %v999
    %1013 = vmatprep.subr.mxu0 0.0
    %1014 = vmatpush1.msra.mxu0 %v1007
    %1015 = vmatprep.subr.mxu0 0.0
    %1016 = vmatpush1.msra.mxu0 0.0
    %1017 = vmatprep.subr.mxu0 0.0
    %1018 = vmatpush1.msra.mxu0 0.0
    %1019 = vmatprep.subr.mxu0 0.0
    %1020 = vmatpush1.msra.mxu0 0.0
    %1021 = vmatprep.subr.mxu0 0.0
    %1022 = vmatpush1.msra.mxu0 0.0
    %1023 = vmatprep.subr.mxu0 0.0
    %1024 = vmatpush1.msra.mxu0 0.0
    %1025 = vmatprep.subr.mxu0 0.0
    %1026 = vmatpush1.msra.mxu0 0.0
    %1027 = vmatprep.subr.mxu0 0.0
    %1028 = vmatpush1.msra.mxu0 0.0
    %1029 = vmatprep.subr.mxu0 0.0
    %1030 = vmatpush1.msra.mxu0 0.0
    %1031 = vmatprep.subr.mxu0 0.0
    %1032 = vmatpush1.msra.mxu0 0.0
    %1033 = vmatprep.subr.mxu0 0.0
    %1034 = vmatpush1.msra.mxu0 0.0
    %1035 = vmatprep.subr.mxu0 0.0
    %1036 = vmatpush1.msra.mxu0 0.0
    %1037 = vmatprep.subr.mxu0 0.0
    %1038 = vmatpush1.msra.mxu0 0.0
    %1039 = vmatprep.subr.mxu0 0.0
    %1040 = vmatpush1.msra.mxu0 0.0
    %1041 = vmatprep.subr.mxu0 0.0
    %1042 = vmatpush1.msra.mxu0 0.0
    %1043 = vmatprep.subr.mxu0 0.0
    %1044 = vmatpush1.msra.mxu0 0.0
    %1045 = vmatprep.subr.mxu0 0.0
    %1046 = vmatpush1.msra.mxu0 0.0
    %1047 = vmatprep.subr.mxu0 0.0
    %1048 = vmatpush1.msra.mxu0 0.0
    %1049 = vmatprep.subr.mxu0 0.0
    %1050 = vmatpush1.msra.mxu0 0.0
    %1051 = vmatprep.subr.mxu0 0.0
    %1052 = vmatpush1.msra.mxu0 0.0
    %1053 = vmatprep.subr.mxu0 0.0
    %1054 = vmatpush1.msra.mxu0 0.0
    %1055 = vmatprep.subr.mxu0 0.0
    %1056 = vmatpush1.msra.mxu0 0.0
    %1057 = vmatprep.subr.mxu0 0.0
    %1058 = vmatpush1.msra.mxu0 0.0
    %1059 = vmatprep.subr.mxu0 0.0
    %1060 = vmatpush1.msra.mxu0 0.0
    %1061 = vmatprep.subr.mxu0 0.0
    %1062 = vmatpush1.msra.mxu0 0.0
    %1063 = vmatprep.subr.mxu0 0.0
    %1064 = vmatpush1.msra.mxu0 0.0
    %1065 = vmatprep.subr.mxu0 0.0
    %1066 = vmatpush1.msra.mxu0 0.0
    %1067 = vmatprep.subr.mxu0 0.0
    %1068 = vmatpush1.msra.mxu0 0.0
    %1069 = vmatprep.subr.mxu0 0.0
    %1070 = vmatpush1.msra.mxu0 0.0
    %1071 = vmatprep.subr.mxu0 0.0
    %1072 = vmatpush1.msra.mxu0 0.0
    %1073 = vmatprep.mubr.f32.mxu0 0.0
    %1074 = vmatmul.mubr.f32.gmra.mrb[0].mxu0 %v1004
    %v1075 = vpop.f32.mrb[0].mxu0
    %v1076 = vadd.f32 0.0, %v1075
    %v1077 = vpop.f32.mrb[0].mxu0
    %1078 = vdwg.mxu0
    %v1079 = vmax.f32 %v1076, 0.0
    %v1081 = vrot.slane %v1079, 4
    %v1083 = vadd.f32 %v1079, %v1081
    %v1084 = vld [vmem:[%s7] sm:$0xff]
    %v1085 = vld [vmem:[%s7 + $0x8] sm:$0xff]
    %v1086 = vld [vmem:[%s7 + $0x10] sm:$0xff]
    %v1087 = vld [vmem:[%s7 + $0x18] sm:$0xff]
    %v1088 = vld [vmem:[%s8] sm:$0xff]
    %v1089 = vld [vmem:[%s8 + $0x8] sm:$0xff]
    %v1090 = vld [vmem:[%s8 + $0x10] sm:$0xff]
    %v1091 = vld [vmem:[%s8 + $0x18] sm:$0xff]
    %v1093 = vrot.slane %v1083, 2
    %vm1094 = vcmask 261120
    %v1095 = vsel %vm1094, %v1093, 0
    %1097 = vmatprep.subr.mxu0 0.0
    %1098 = vmatpush1.msra.mxu0 %v1088
    %1099 = vmatprep.subr.mxu0 0.0
    %1100 = vmatpush1.msra.mxu0 %v1089
    %1101 = vmatprep.subr.mxu0 0.0
    %1102 = vmatpush1.msra.mxu0 %v1090
    %1103 = vmatprep.subr.mxu0 0.0
    %1104 = vmatpush1.msra.mxu0 %v1091
    %1105 = vmatprep.subr.mxu0 0.0
    %1106 = vmatpush1.msra.mxu0 0.0
    %1107 = vmatprep.subr.mxu0 0.0
    %1108 = vmatpush1.msra.mxu0 0.0
    %1109 = vmatprep.subr.mxu0 0.0
    %1110 = vmatpush1.msra.mxu0 0.0
    %1111 = vmatprep.subr.mxu0 0.0
    %1112 = vmatpush1.msra.mxu0 0.0
    %1113 = vmatprep.subr.mxu0 0.0
    %1114 = vmatpush1.msra.mxu0 0.0
    %1115 = vmatprep.subr.mxu0 0.0
    %1116 = vmatpush1.msra.mxu0 0.0
    %1117 = vmatprep.subr.mxu0 0.0
    %1118 = vmatpush1.msra.mxu0 0.0
    %1119 = vmatprep.subr.mxu0 0.0
    %1120 = vmatpush1.msra.mxu0 0.0
    %1121 = vmatprep.subr.mxu0 0.0
    %1122 = vmatpush1.msra.mxu0 0.0
    %1123 = vmatprep.subr.mxu0 0.0
    %1124 = vmatpush1.msra.mxu0 0.0
    %1125 = vmatprep.subr.mxu0 0.0
    %1126 = vmatpush1.msra.mxu0 0.0
    %1127 = vmatprep.subr.mxu0 0.0
    %1128 = vmatpush1.msra.mxu0 0.0
    %1129 = vmatprep.subr.mxu0 0.0
    %1130 = vmatpush1.msra.mxu0 0.0
    %1131 = vmatprep.subr.mxu0 0.0
    %1132 = vmatpush1.msra.mxu0 0.0
    %1133 = vmatprep.subr.mxu0 0.0
    %1134 = vmatpush1.msra.mxu0 0.0
    %1135 = vmatprep.subr.mxu0 0.0
    %1136 = vmatpush1.msra.mxu0 0.0
    %1137 = vmatprep.subr.mxu0 0.0
    %1138 = vmatpush1.msra.mxu0 0.0
    %1139 = vmatprep.subr.mxu0 0.0
    %1140 = vmatpush1.msra.mxu0 0.0
    %1141 = vmatprep.subr.mxu0 0.0
    %1142 = vmatpush1.msra.mxu0 0.0
    %1143 = vmatprep.subr.mxu0 0.0
    %1144 = vmatpush1.msra.mxu0 0.0
    %1145 = vmatprep.subr.mxu0 0.0
    %1146 = vmatpush1.msra.mxu0 0.0
    %1147 = vmatprep.subr.mxu0 0.0
    %1148 = vmatpush1.msra.mxu0 0.0
    %1149 = vmatprep.subr.mxu0 0.0
    %1150 = vmatpush1.msra.mxu0 0.0
    %1151 = vmatprep.subr.mxu0 0.0
    %1152 = vmatpush1.msra.mxu0 0.0
    %1153 = vmatprep.subr.mxu0 0.0
    %1154 = vmatpush1.msra.mxu0 0.0
    %1155 = vmatprep.subr.mxu0 0.0
    %1156 = vmatpush1.msra.mxu0 0.0
    %1157 = vmatprep.subr.mxu0 0.0
    %1158 = vmatpush1.msra.mxu0 0.0
    %1159 = vmatprep.subr.mxu0 0.0
    %1160 = vmatpush1.msra.mxu0 0.0
    %1161 = vmatprep.mubr.f32.mxu0 0.0
    %1162 = vmatmul.mubr.f32.gmra.mrb[0].mxu0 %v1095
    %v1163 = vpop.f32.mrb[0].mxu0
    %v1164 = vadd.f32 0.0, %v1163
    %v1165 = vpop.f32.mrb[0].mxu0
    %1166 = vdwg.mxu0
    %v1167 = vsel %vm1094, %v1083, 0
    %1169 = vmatprep.subr.mxu0 0.0
    %1170 = vmatpush1.msra.mxu0 %v1084
    %1171 = vmatprep.subr.mxu0 0.0
    %1172 = vmatpush1.msra.mxu0 %v1085
    %1173 = vmatprep.subr.mxu0 0.0
    %1174 = vmatpush1.msra.mxu0 %v1086
    %1175 = vmatprep.subr.mxu0 0.0
    %1176 = vmatpush1.msra.mxu0 %v1087
    %1177 = vmatprep.subr.mxu0 0.0
    %1178 = vmatpush1.msra.mxu0 0.0
    %1179 = vmatprep.subr.mxu0 0.0
    %1180 = vmatpush1.msra.mxu0 0.0
    %1181 = vmatprep.subr.mxu0 0.0
    %1182 = vmatpush1.msra.mxu0 0.0
    %1183 = vmatprep.subr.mxu0 0.0
    %1184 = vmatpush1.msra.mxu0 0.0
    %1185 = vmatprep.subr.mxu0 0.0
    %1186 = vmatpush1.msra.mxu0 0.0
    %1187 = vmatprep.subr.mxu0 0.0
    %1188 = vmatpush1.msra.mxu0 0.0
    %1189 = vmatprep.subr.mxu0 0.0
    %1190 = vmatpush1.msra.mxu0 0.0
    %1191 = vmatprep.subr.mxu0 0.0
    %1192 = vmatpush1.msra.mxu0 0.0
    %1193 = vmatprep.subr.mxu0 0.0
    %1194 = vmatpush1.msra.mxu0 0.0
    %1195 = vmatprep.subr.mxu0 0.0
    %1196 = vmatpush1.msra.mxu0 0.0
    %1197 = vmatprep.subr.mxu0 0.0
    %1198 = vmatpush1.msra.mxu0 0.0
    %1199 = vmatprep.subr.mxu0 0.0
    %1200 = vmatpush1.msra.mxu0 0.0
    %1201 = vmatprep.subr.mxu0 0.0
    %1202 = vmatpush1.msra.mxu0 0.0
    %1203 = vmatprep.subr.mxu0 0.0
    %1204 = vmatpush1.msra.mxu0 0.0
    %1205 = vmatprep.subr.mxu0 0.0
    %1206 = vmatpush1.msra.mxu0 0.0
    %1207 = vmatprep.subr.mxu0 0.0
    %1208 = vmatpush1.msra.mxu0 0.0
    %1209 = vmatprep.subr.mxu0 0.0
    %1210 = vmatpush1.msra.mxu0 0.0
    %1211 = vmatprep.subr.mxu0 0.0
    %1212 = vmatpush1.msra.mxu0 0.0
    %1213 = vmatprep.subr.mxu0 0.0
    %1214 = vmatpush1.msra.mxu0 0.0
    %1215 = vmatprep.subr.mxu0 0.0
    %1216 = vmatpush1.msra.mxu0 0.0
    %1217 = vmatprep.subr.mxu0 0.0
    %1218 = vmatpush1.msra.mxu0 0.0
    %1219 = vmatprep.subr.mxu0 0.0
    %1220 = vmatpush1.msra.mxu0 0.0
    %1221 = vmatprep.subr.mxu0 0.0
    %1222 = vmatpush1.msra.mxu0 0.0
    %1223 = vmatprep.subr.mxu0 0.0
    %1224 = vmatpush1.msra.mxu0 0.0
    %1225 = vmatprep.subr.mxu0 0.0
    %1226 = vmatpush1.msra.mxu0 0.0
    %1227 = vmatprep.subr.mxu0 0.0
    %1228 = vmatpush1.msra.mxu0 0.0
    %1229 = vmatprep.subr.mxu0 0.0
    %1230 = vmatpush1.msra.mxu0 0.0
    %1231 = vmatprep.subr.mxu0 0.0
    %1232 = vmatpush1.msra.mxu0 0.0
    %1233 = vmatprep.mubr.f32.mxu0 0.0
    %1234 = vmatmul.mubr.f32.gmra.mrb[0].mxu0 %v1167
    %v1235 = vpop.f32.mrb[0].mxu0
    %v1236 = vadd.f32 %v1164, %v1235
    %v1237 = vpop.f32.mrb[0].mxu0
    %1238 = vdwg.mxu0
    %vm1239 = vcmask 74752
    %1240 = vst.msk [vmem:[#allocation5] sm:$0x3] %vm1239, %v1236
    // Predicated region
    $region38: #{pallas_forward.1} parent=1 // pred_check
      _
    $region39: #{pallas_forward.1} parent=1 // pred_check_branch
      %1242 = sbr.rel (0) target = $region41
    $region40: #{pallas_forward.1} parent=1 // pred_region
      %s1244 = ssub.s32 32, 32
      %1245 = vsyncadd [#allocation6], %s1244
      %s1247 = sshll.u32 [#allocation5], 4
      %s1248 = int_to_ptr.vmem [resolvable:$true] %s1247
      %1250 = dma.vmem_to_hbm [thread:$0]  %s1248, 32, %s9, [#allocation6]
    $region41: #{pallas_forward.1} parent=1 // pred_fallthru
      _
    // Predicated region
    $region42: #{pallas_forward.1} parent=1 // pred_check
      _
    $region43: #{pallas_forward.1} parent=1 // pred_check_branch
      %1252 = sbr.rel (0) target = $region45
    $region44: #{pallas_forward.1} parent=1 // pred_region
      %1253 = dma.done [#allocation6], 32
    $region45: #{pallas_forward.1} parent=1 // pred_fallthru
      _
    %1254 = vsyncpa [#allocation6], 1

</llo_original>
